<compile_context>
chip_gen: v7x
topology: tpu7x:2x2x1
jax: 0.10.0
libtpu: 0.0.40
codegen_flags: <defaults>
</compile_context>

<pallas_src>
import functools

import jax
import jax.numpy as jnp
import numpy as np
from jax import lax
from jax.experimental import pallas as pl
from jax.experimental.pallas import tpu as pltpu

NEG_SLOPE_ATTN = 0.2    # DGL GATConv LeakyReLU inside attention scores
NEG_SLOPE_ACT = 0.01    # F.leaky_relu default, applied as GATConv activation
MASK_VAL = -1e30


def _leaky(x, slope):
    return jnp.where(x >= 0, x, slope * x)


def _round_up(x, m):
    return ((x + m - 1) // m) * m


# --------------------- phase 1: both GATConv relations (dst-tiled) --------------------- #
def _than_phase1_kernel(heads, out_size, seg,
                        hd_ref, adjb0_ref, adjb1_ref,
                        hs0_ref, hs0t_ref, wsrc0_ref, welt0_ref, bias0_ref,
                        hs1_ref, hs1t_ref, wsrc1_ref, welt1_ref, bias1_ref,
                        wdst_ref, hmask_ref,
                        ntw1_ref, ntb1_ref, ntw2_ref,
                        z_ref, parts_ref):
    hf = heads * out_size
    # One wide bf16 matmul for every dst-side projection of both relations.
    # Each relation segment (128-lane aligned) = [w_res | w_er | zero pad].
    d_all = jnp.dot(hd_ref[...], wdst_ref[...], preferred_element_type=jnp.float32)

    def one_relation(r, hs_ref, hst_ref, wsrc_ref, welt_ref, bias_ref, adjb_ref):
        off = r * seg
        res = d_all[:, off:off + hf]                     # (tile, HF) residual proj
        er = d_all[:, off + hf:off + hf + heads]         # (tile, H)  dst attn logits

        adjb = adjb_ref[...].astype(jnp.float32)         # additive mask, single upcast
        has_edge = (jnp.max(adjb, axis=1, keepdims=True) > -1e20).astype(jnp.float32)

        fs = jnp.dot(hs_ref[...], wsrc_ref[...], preferred_element_type=jnp.float32)
        fs_bf = fs.astype(jnp.bfloat16)                  # (N_src, HF) aggregation RHS
        # el^T directly from host-transposed operands -> no in-kernel transpose.
        elT = jnp.dot(welt_ref[...], hst_ref[...], preferred_element_type=jnp.float32)

        rst = jnp.zeros(res.shape, jnp.float32)
        for h in range(heads):                           # static, tiny head count
            e = er[:, h:h + 1] + elT[h:h + 1, :]         # (tile, N_src)
            e = _leaky(e, NEG_SLOPE_ATTN) + adjb         # masked entries ~ -1e30
            m = jnp.max(e, axis=1, keepdims=True)
            p = jnp.exp(e - m)                           # masked entries underflow to 0
            denom = jnp.sum(p, axis=1, keepdims=True)
            # normalize after the matmul; zero-in-degree rows zeroed by has_edge
            scale = has_edge * pl.reciprocal(denom, approx=True)
            q = jnp.dot(p.astype(jnp.bfloat16), fs_bf,
                        preferred_element_type=jnp.float32)   # (tile, HF), lane-dense
            rst = rst + q * (scale * hmask_ref[h:h + 1, :])   # keep head-h columns only
        return _leaky(rst + res + bias_ref[...], NEG_SLOPE_ACT)

    z0 = one_relation(0, hs0_ref, hs0t_ref, wsrc0_ref, welt0_ref, bias0_ref, adjb0_ref)
    z1 = one_relation(1, hs1_ref, hs1t_ref, wsrc1_ref, welt1_ref, bias1_ref, adjb1_ref)
    z_ref[0] = z0
    z_ref[1] = z1

    # NodetypeAttention partial scores for this dst tile (w2 is linear -> the
    # node-mean is the sum of per-tile partials divided by N, done in phase 2).
    h0 = jnp.tanh(jnp.dot(z0, ntw1_ref[...], preferred_element_type=jnp.float32)
                  + ntb1_ref[...])
    h1 = jnp.tanh(jnp.dot(z1, ntw1_ref[...], preferred_element_type=jnp.float32)
                  + ntb1_ref[...])
    p0 = jnp.dot(jnp.sum(h0, axis=0, keepdims=True), ntw2_ref[...],
                 preferred_element_type=jnp.float32)          # (1, 1)
    p1 = jnp.dot(jnp.sum(h1, axis=0, keepdims=True), ntw2_ref[...],
                 preferred_element_type=jnp.float32)
    row = lax.broadcasted_iota(jnp.int32, (8, 128), 0)
    col = lax.broadcasted_iota(jnp.int32, (8, 128), 1)
    parts = (jnp.where((row == 0) & (col == 0), p0, 0.0)
             + jnp.where((row == 0) & (col == 1), p1, 0.0))
    parts_ref[...] = parts[None]


# ----------------- phase 2: NodetypeAttention softmax + blend (dst-tiled) ----------------- #
def _than_phase2_kernel(inv_n, z_ref, parts_ref, out_ref):
    parts = parts_ref[...]                                    # (num_tiles, 8, 128)
    s0 = jnp.sum(parts[:, 0:1, 0:1], axis=0) * inv_n          # (1, 1)
    s1 = jnp.sum(parts[:, 0:1, 1:2], axis=0) * inv_n
    m = jnp.maximum(s0, s1)
    e0 = jnp.exp(s0 - m)
    e1 = jnp.exp(s1 - m)
    inv = 1.0 / (e0 + e1)
    out_ref[...] = (e0 * inv) * z_ref[0] + (e1 * inv) * z_ref[1]


# --------------------------- host-side weight folding --------------------------- #
def _fold_gat_params(p, heads, out_size, seg):
    """attn_l/attn_r folded into per-head logit weights; dst segment 128-padded."""
    hf = heads * out_size
    sel = np.zeros((hf, heads), np.float32)
    for h in range(heads):
        sel[h * out_size:(h + 1) * out_size, h] = 1.0
    sel = jnp.asarray(sel)
    w_el = (p["w_src"] * p["attn_l"]) @ sel               # (d_src, H)
    w_er = (p["w_dst"] * p["attn_r"]) @ sel               # (d_dst, H)
    d_dst = p["w_res"].shape[0]
    w_dst_seg = jnp.concatenate(
        [p["w_res"], w_er, jnp.zeros((d_dst, seg - hf - heads), jnp.float32)],
        axis=1).astype(jnp.bfloat16)                       # (d_dst, seg)
    return (p["w_src"].astype(jnp.bfloat16),
            jnp.transpose(w_el).astype(jnp.bfloat16),      # (H, d_src) for elT matmul
            w_dst_seg,
            p["bias"].astype(jnp.float32))


def than_layer(temp_h, pid_adj, pid_h, od_adj, od_h, pid_p, od_p, nt_p,
               heads, out_size, tile_dst=None):
    hf = heads * out_size
    n_dst, in_size = temp_h.shape
    n_pid = pid_h.shape[0]
    n_od = od_h.shape[0]

    seg = _round_up(hf + heads, 128)                      # 128-aligned dst segments
    wsrc0, welt0, wd0, b0 = _fold_gat_params(pid_p, heads, out_size, seg)
    wsrc1, welt1, wd1, b1 = _fold_gat_params(od_p, heads, out_size, seg)
    w_dst_all = jnp.concatenate([wd0, wd1], axis=1)       # (in_size, 2*seg) bf16

    # Additive adjacency bias (0 = edge, -1e30 = non-edge), bf16 halves DMA bytes.
    adjb0 = jnp.where(pid_adj > 0, 0.0, MASK_VAL).astype(jnp.bfloat16)
    adjb1 = jnp.where(od_adj > 0, 0.0, MASK_VAL).astype(jnp.bfloat16)

    head_mask = np.zeros((heads, hf), np.float32)
    for h in range(heads):
        head_mask[h, h * out_size:(h + 1) * out_size] = 1.0
    head_mask = jnp.asarray(head_mask)

    # NodetypeAttention weights, hidden dim zero-padded to 128 lanes (exact).
    hidden = nt_p["w1"].shape[1]
    hpad = _round_up(hidden, 128)
    w1p = jnp.pad(nt_p["w1"], ((0, 0), (0, hpad - hidden)))
    b1p = jnp.pad(nt_p["b1"], ((0, 0), (0, hpad - hidden)))
    w2p = jnp.pad(nt_p["w2"], ((0, hpad - hidden), (0, 0)))

    hd_bf = temp_h.astype(jnp.bfloat16)
    hs0_bf = pid_h.astype(jnp.bfloat16)
    hs1_bf = od_h.astype(jnp.bfloat16)
    hs0t_bf = jnp.transpose(pid_h).astype(jnp.bfloat16)
    hs1t_bf = jnp.transpose(od_h).astype(jnp.bfloat16)

    if tile_dst is None:
        tile_dst = n_dst if n_dst <= 512 else 512
    assert n_dst % tile_dst == 0, "TODO(synk): ragged last dst tile"
    num_tiles = n_dst // tile_dst

    # Per-generation VMEM budget (v5e/v6e 128 MiB, v7x 64 MiB physical).
    def nbytes(a):
        return int(a.size) * a.dtype.itemsize

    resident = sum(nbytes(a) for a in
                   (hs0_bf, hs0t_bf, wsrc0, welt0, b0,
                    hs1_bf, hs1t_bf, wsrc1, welt1, b1,
                    w_dst_all, head_mask, w1p, b1p, w2p))
    tile_io = (tile_dst * (in_size + n_pid + n_od) * 2     # bf16 tiled inputs
               + 2 * tile_dst * hf * 4 + 8 * 128 * 4)      # f32 tiled outputs
    try:
        cap = pltpu.get_tpu_info().vmem_capacity_bytes
    except Exception:
        cap = 64 * 1024 * 1024
    vmem_limit = int(min(max(resident + 6 * tile_io + (8 << 20), 16 << 20),
                         int(0.45 * cap)))

    def _full(a):
        return pl.BlockSpec(a.shape, lambda *_: (0,) * a.ndim)

    kernel1 = functools.partial(_than_phase1_kernel, heads, out_size, seg)
    z_pack, parts = pl.pallas_call(
        kernel1,
        grid=(num_tiles,),
        in_specs=[
            pl.BlockSpec((tile_dst, in_size), lambda i: (i, 0)),   # temp_h
            pl.BlockSpec((tile_dst, n_pid), lambda i: (i, 0)),     # adj bias (pid)
            pl.BlockSpec((tile_dst, n_od), lambda i: (i, 0)),      # adj bias (od)
            _full(hs0_bf), _full(hs0t_bf), _full(wsrc0), _full(welt0), _full(b0),
            _full(hs1_bf), _full(hs1t_bf), _full(wsrc1), _full(welt1), _full(b1),
            _full(w_dst_all), _full(head_mask),
            _full(w1p), _full(b1p), _full(w2p),
        ],
        out_specs=(
            pl.BlockSpec((2, tile_dst, hf), lambda i: (0, i, 0)),  # z0 / z1
            pl.BlockSpec((1, 8, 128), lambda i: (i, 0, 0)),        # per-tile partial scores
        ),
        out_shape=(
            jax.ShapeDtypeStruct((2, n_dst, hf), jnp.float32),
            jax.ShapeDtypeStruct((num_tiles, 8, 128), jnp.float32),
        ),
        compiler_params=pltpu.CompilerParams(
            dimension_semantics=("parallel",),
            vmem_limit_bytes=vmem_limit),
    )(hd_bf, adjb0, adjb1,
      hs0_bf, hs0t_bf, wsrc0, welt0, b0,
      hs1_bf, hs1t_bf, wsrc1, welt1, b1,
      w_dst_all, head_mask, w1p, b1p, w2p)

    kernel2 = functools.partial(_than_phase2_kernel, 1.0 / float(n_dst))
    out = pl.pallas_call(
        kernel2,
        grid=(num_tiles,),
        in_specs=[
            pl.BlockSpec((2, tile_dst, hf), lambda i: (0, i, 0)),
            pl.BlockSpec((num_tiles, 8, 128), lambda i: (0, 0, 0)),
        ],
        out_specs=pl.BlockSpec((tile_dst, hf), lambda i: (i, 0)),
        out_shape=jax.ShapeDtypeStruct((n_dst, hf), jnp.float32),
        compiler_params=pltpu.CompilerParams(
            dimension_semantics=("parallel",),
            vmem_limit_bytes=vmem_limit),
    )(z_pack, parts)
    return out


# ------------------- standalone NodetypeAttention kernel (spec module) ------------------- #
def _ntattn_kernel(z0_ref, z1_ref, w1_ref, b1_ref, w2_ref, out_ref):
    z0 = z0_ref[...]
    z1 = z1_ref[...]
    inv_n = 1.0 / z0.shape[0]
    h0 = jnp.tanh(jnp.dot(z0, w1_ref[...], preferred_element_type=jnp.float32) + b1_ref[...])
    h1 = jnp.tanh(jnp.dot(z1, w1_ref[...], preferred_element_type=jnp.float32) + b1_ref[...])
    s0 = jnp.dot(jnp.sum(h0, axis=0, keepdims=True), w2_ref[...],
                 preferred_element_type=jnp.float32) * inv_n        # (1, 1)
    s1 = jnp.dot(jnp.sum(h1, axis=0, keepdims=True), w2_ref[...],
                 preferred_element_type=jnp.float32) * inv_n
    m = jnp.maximum(s0, s1)
    e0 = jnp.exp(s0 - m)
    e1 = jnp.exp(s1 - m)
    inv = 1.0 / (e0 + e1)
    out_ref[...] = (e0 * inv) * z0 + (e1 * inv) * z1


def nodetype_attention(z0, z1, params):
    hidden = params["w1"].shape[1]
    hpad = _round_up(hidden, 128)                      # 64 -> 128 lanes, exact padding
    w1p = jnp.pad(params["w1"], ((0, 0), (0, hpad - hidden)))
    b1p = jnp.pad(params["b1"], ((0, 0), (0, hpad - hidden)))
    w2p = jnp.pad(params["w2"], ((0, hpad - hidden), (0, 0)))
    vmem = pl.BlockSpec(memory_space=pltpu.MemorySpace.VMEM)
    return pl.pallas_call(
        _ntattn_kernel,
        out_shape=jax.ShapeDtypeStruct(z0.shape, jnp.float32),
        in_specs=[vmem] * 5,
        out_specs=vmem,
    )(z0, z1, w1p, b1p, w2p)


# --------------------------------- plain-JAX reference --------------------------------- #
def _gat_ref(h_src, h_dst, adj, p, heads, out_size):
    fs = h_src @ p["w_src"]
    fd = h_dst @ p["w_dst"]
    fs3 = fs.reshape(-1, heads, out_size)
    fd3 = fd.reshape(-1, heads, out_size)
    al = p["attn_l"].reshape(1, heads, out_size)
    ar = p["attn_r"].reshape(1, heads, out_size)
    el = (fs3 * al).sum(-1)
    er = (fd3 * ar).sum(-1)
    e = er[:, None, :] + el[None, :, :]
    e = jnp.where(e >= 0, e, NEG_SLOPE_ATTN * e)
    e = jnp.where(adj[:, :, None] > 0, e, MASK_VAL)
    m = e.max(axis=1, keepdims=True)
    pe = jnp.exp(e - m) * adj[:, :, None]
    den = pe.sum(axis=1, keepdims=True)
    den = jnp.where(den == 0, 1.0, den)
    alpha = pe / den
    rst = jnp.einsum("dsh,shf->dhf", alpha, fs3).reshape(-1, heads * out_size)
    out = rst + h_dst @ p["w_res"] + p["bias"]
    return jnp.where(out >= 0, out, NEG_SLOPE_ACT * out)


def _nt_ref(z0, z1, p):
    z = jnp.stack([z0, z1], axis=1)                                  # (N, 2, D)
    w = (jnp.tanh(z @ p["w1"] + p["b1"]) @ p["w2"]).mean(0)          # (2, 1)
    beta = jax.nn.softmax(w, axis=0)
    return (beta[None] * z).sum(1)


def _than_ref(temp_h, pid_adj, pid_h, od_adj, od_h, pid_p, od_p, nt_p, heads, out_size):
    z0 = _gat_ref(pid_h, temp_h, pid_adj, pid_p, heads, out_size)
    z1 = _gat_ref(od_h, temp_h, od_adj, od_p, heads, out_size)
    return _nt_ref(z0, z1, nt_p)


# --------------------------------------- main --------------------------------------- #
if __name__ == "__main__":
    in_size, pid_size, od_size = 16, 8, 8
    out_size, heads = 8, 4
    hf = out_size * heads
    hidden = 64
    n_dst, n_pid, n_od = 16, 16, 8

    key = jax.random.PRNGKey(0)
    ks = jax.random.split(key, 16)

    temp_h = jax.random.normal(ks[0], (n_dst, in_size), jnp.float32)
    pid_h = jax.random.normal(ks[1], (n_pid, pid_size), jnp.float32)
    od_h = jax.random.normal(ks[2], (n_od, od_size), jnp.float32)
    pid_adj = (jax.random.uniform(ks[3], (n_dst, n_pid)) < 0.4).astype(jnp.float32)
    od_adj = (jax.random.uniform(ks[4], (n_dst, n_od)) < 0.4).astype(jnp.float32)

    def init_gat_params(kbase, d_src, d_dst):
        k = jax.random.split(kbase, 6)
        s = 0.2
        return {
            "w_src": s * jax.random.normal(k[0], (d_src, hf), jnp.float32),
            "w_dst": s * jax.random.normal(k[1], (d_dst, hf), jnp.float32),
            "attn_l": s * jax.random.normal(k[2], (1, hf), jnp.float32),
            "attn_r": s * jax.random.normal(k[3], (1, hf), jnp.float32),
            "w_res": s * jax.random.normal(k[4], (d_dst, hf), jnp.float32),
            "bias": s * jax.random.normal(k[5], (1, hf), jnp.float32),
        }

    pid_params = init_gat_params(ks[5], pid_size, in_size)
    od_params = init_gat_params(ks[6], od_size, in_size)
    nt_params = {
        "w1": 0.2 * jax.random.normal(ks[7], (hf, hidden), jnp.float32),
        "b1": 0.2 * jax.random.normal(ks[8], (1, hidden), jnp.float32),
        "w2": 0.2 * jax.random.normal(ks[9], (hidden, 1), jnp.float32),
    }

    # Fused THANLayer (bf16 MXU operands -> loosened tolerance per review).
    out = than_layer(temp_h, pid_adj, pid_h, od_adj, od_h,
                     pid_params, od_params, nt_params, heads, out_size)
    out = jax.block_until_ready(out)
    ref = _than_ref(temp_h, pid_adj, pid_h, od_adj, od_h,
                    pid_params, od_params, nt_params, heads, out_size)
    np.testing.assert_allclose(np.asarray(out), np.asarray(ref), rtol=5e-2, atol=5e-2)

    # Standalone NodetypeAttention kernel (the spec module) on its own inputs.
    z0 = jax.random.normal(ks[10], (n_dst, hf), jnp.float32)
    z1 = jax.random.normal(ks[11], (n_dst, hf), jnp.float32)
    out_nt = jax.block_until_ready(nodetype_attention(z0, z1, nt_params))
    ref_nt = _nt_ref(z0, z1, nt_params)
    np.testing.assert_allclose(np.asarray(out_nt), np.asarray(ref_nt),
                               rtol=1e-2, atol=1e-2)

    print("KERNEL_OK")
</pallas_src>

<mosaic_0001>
module attributes {stable_mosaic.version = 11 : i64} {
  func.func @_than_phase1_kernel(%arg0: i32, %arg1: memref<16x16xbf16, #tpu.memory_space<vmem>>, %arg2: memref<16x16xbf16, #tpu.memory_space<vmem>>, %arg3: memref<16x8xbf16, #tpu.memory_space<vmem>>, %arg4: memref<16x8xbf16, #tpu.memory_space<vmem>>, %arg5: memref<8x16xbf16, #tpu.memory_space<vmem>>, %arg6: memref<8x32xbf16, #tpu.memory_space<vmem>>, %arg7: memref<4x8xbf16, #tpu.memory_space<vmem>>, %arg8: memref<1x32xf32, #tpu.memory_space<vmem>>, %arg9: memref<8x8xbf16, #tpu.memory_space<vmem>>, %arg10: memref<8x8xbf16, #tpu.memory_space<vmem>>, %arg11: memref<8x32xbf16, #tpu.memory_space<vmem>>, %arg12: memref<4x8xbf16, #tpu.memory_space<vmem>>, %arg13: memref<1x32xf32, #tpu.memory_space<vmem>>, %arg14: memref<16x256xbf16, #tpu.memory_space<vmem>>, %arg15: memref<4x32xf32, #tpu.memory_space<vmem>>, %arg16: memref<32x128xf32, #tpu.memory_space<vmem>>, %arg17: memref<1x128xf32, #tpu.memory_space<vmem>>, %arg18: memref<128x1xf32, #tpu.memory_space<vmem>>, %arg19: memref<2x16x32xf32, #tpu.memory_space<vmem>>, %arg20: memref<1x8x128xf32, #tpu.memory_space<vmem>>) attributes {dimension_semantics = [#tpu.dimension_semantics<parallel>], iteration_bounds = array<i64: 1>, scalar_prefetch = 0 : i64, scratch_operands = 0 : i64, tpu.core_type = #tpu.core_type<tc>, window_params = [{transform_indices = @transform_0, window_bounds = array<i64: 16, 16>}, {transform_indices = @transform_1, window_bounds = array<i64: 16, 16>}, {transform_indices = @transform_2, window_bounds = array<i64: 16, 8>}, {pipeline_mode = #tpu.pipeline_mode<synchronous>, transform_indices = @transform_3, window_bounds = array<i64: 16, 8>}, {pipeline_mode = #tpu.pipeline_mode<synchronous>, transform_indices = @transform_4, window_bounds = array<i64: 8, 16>}, {pipeline_mode = #tpu.pipeline_mode<synchronous>, transform_indices = @transform_5, window_bounds = array<i64: 8, 32>}, {pipeline_mode = #tpu.pipeline_mode<synchronous>, transform_indices = @transform_6, window_bounds = array<i64: 4, 8>}, {pipeline_mode = #tpu.pipeline_mode<synchronous>, transform_indices = @transform_7, window_bounds = array<i64: 1, 32>}, {pipeline_mode = #tpu.pipeline_mode<synchronous>, transform_indices = @transform_8, window_bounds = array<i64: 8, 8>}, {pipeline_mode = #tpu.pipeline_mode<synchronous>, transform_indices = @transform_9, window_bounds = array<i64: 8, 8>}, {pipeline_mode = #tpu.pipeline_mode<synchronous>, transform_indices = @transform_10, window_bounds = array<i64: 8, 32>}, {pipeline_mode = #tpu.pipeline_mode<synchronous>, transform_indices = @transform_11, window_bounds = array<i64: 4, 8>}, {pipeline_mode = #tpu.pipeline_mode<synchronous>, transform_indices = @transform_12, window_bounds = array<i64: 1, 32>}, {pipeline_mode = #tpu.pipeline_mode<synchronous>, transform_indices = @transform_13, window_bounds = array<i64: 16, 256>}, {pipeline_mode = #tpu.pipeline_mode<synchronous>, transform_indices = @transform_14, window_bounds = array<i64: 4, 32>}, {pipeline_mode = #tpu.pipeline_mode<synchronous>, transform_indices = @transform_15, window_bounds = array<i64: 32, 128>}, {pipeline_mode = #tpu.pipeline_mode<synchronous>, transform_indices = @transform_16, window_bounds = array<i64: 1, 128>}, {pipeline_mode = #tpu.pipeline_mode<synchronous>, transform_indices = @transform_17, window_bounds = array<i64: 128, 1>}, {transform_indices = @transform_18, window_bounds = array<i64: 2, 16, 32>}, {transform_indices = @transform_19, window_bounds = array<i64: 1, 8, 128>}]} {
    %c0 = arith.constant 0 : index
    %c0_0 = arith.constant 0 : index
    %0 = vector.load %arg1[%c0, %c0_0] : memref<16x16xbf16, #tpu.memory_space<vmem>>, vector<16x16xbf16>
    %c0_1 = arith.constant 0 : index
    %c0_2 = arith.constant 0 : index
    %1 = vector.load %arg14[%c0_1, %c0_2] : memref<16x256xbf16, #tpu.memory_space<vmem>>, vector<16x256xbf16>
    %cst = arith.constant dense<0.000000e+00> : vector<16x256xf32>
    %2 = tpu.matmul %0, %1, %cst {dimension_numbers = #tpu.dot_dimension_numbers<[1], [0], [0], [1], [0, 0, 1, 1], [], []>} : vector<16x16xbf16>, vector<16x256xbf16>, vector<16x256xf32> -> vector<16x256xf32>
    %3 = vector.extract_strided_slice %2 {offsets = [0, 0], sizes = [16, 32], strides = [1, 1]} : vector<16x256xf32> to vector<16x32xf32>
    %4 = vector.extract_strided_slice %2 {offsets = [0, 32], sizes = [16, 4], strides = [1, 1]} : vector<16x256xf32> to vector<16x4xf32>
    %c0_3 = arith.constant 0 : index
    %c0_4 = arith.constant 0 : index
    %5 = vector.load %arg2[%c0_3, %c0_4] : memref<16x16xbf16, #tpu.memory_space<vmem>>, vector<16x16xbf16>
    %6 = arith.extf %5 : vector<16x16xbf16> to vector<16x16xf32>
    %cst_5 = arith.constant dense<0xFF800000> : vector<16xf32>
    %7 = vector.multi_reduction <maximumf>, %6, %cst_5 [1] : vector<16x16xf32> to vector<16xf32>
    %8 = vector.shape_cast %7 : vector<16xf32> to vector<16x1xf32>
    %cst_6 = arith.constant -1.000000e+20 : f32
    %9 = vector.broadcast %cst_6 : f32 to vector<16x1xf32>
    %10 = arith.cmpf ogt, %8, %9 : vector<16x1xf32>
    %11 = arith.extui %10 : vector<16x1xi1> to vector<16x1xi32>
    %12 = arith.sitofp %11 : vector<16x1xi32> to vector<16x1xf32>
    %c0_7 = arith.constant 0 : index
    %c0_8 = arith.constant 0 : index
    %13 = vector.load %arg4[%c0_7, %c0_8] : memref<16x8xbf16, #tpu.memory_space<vmem>>, vector<16x8xbf16>
    %c0_9 = arith.constant 0 : index
    %c0_10 = arith.constant 0 : index
    %14 = vector.load %arg6[%c0_9, %c0_10] : memref<8x32xbf16, #tpu.memory_space<vmem>>, vector<8x32xbf16>
    %cst_11 = arith.constant dense<0.000000e+00> : vector<16x32xf32>
    %15 = tpu.matmul %13, %14, %cst_11 {dimension_numbers = #tpu.dot_dimension_numbers<[1], [0], [0], [1], [0, 0, 1, 1], [], []>} : vector<16x8xbf16>, vector<8x32xbf16>, vector<16x32xf32> -> vector<16x32xf32>
    %16 = arith.truncf %15 : vector<16x32xf32> to vector<16x32xbf16>
    %c0_12 = arith.constant 0 : index
    %c0_13 = arith.constant 0 : index
    %17 = vector.load %arg7[%c0_12, %c0_13] : memref<4x8xbf16, #tpu.memory_space<vmem>>, vector<4x8xbf16>
    %c0_14 = arith.constant 0 : index
    %c0_15 = arith.constant 0 : index
    %18 = vector.load %arg5[%c0_14, %c0_15] : memref<8x16xbf16, #tpu.memory_space<vmem>>, vector<8x16xbf16>
    %cst_16 = arith.constant dense<0.000000e+00> : vector<4x16xf32>
    %19 = tpu.matmul %17, %18, %cst_16 {dimension_numbers = #tpu.dot_dimension_numbers<[1], [0], [0], [1], [0, 0, 1, 1], [], []>} : vector<4x8xbf16>, vector<8x16xbf16>, vector<4x16xf32> -> vector<4x16xf32>
    %cst_17 = arith.constant 0.000000e+00 : f32
    %20 = vector.broadcast %cst_17 : f32 to vector<16x32xf32>
    %21 = vector.extract_strided_slice %4 {offsets = [0, 0], sizes = [16, 1], strides = [1, 1]} : vector<16x4xf32> to vector<16x1xf32>
    %22 = vector.extract_strided_slice %19 {offsets = [0, 0], sizes = [1, 16], strides = [1, 1]} : vector<4x16xf32> to vector<1x16xf32>
    %23 = vector.broadcast %21 : vector<16x1xf32> to vector<16x16xf32>
    %24 = vector.broadcast %22 : vector<1x16xf32> to vector<16x16xf32>
    %25 = arith.addf %23, %24 : vector<16x16xf32>
    %cst_18 = arith.constant 0.000000e+00 : f32
    %26 = vector.broadcast %cst_18 : f32 to vector<16x16xf32>
    %27 = arith.cmpf oge, %25, %26 : vector<16x16xf32>
    %cst_19 = arith.constant 2.000000e-01 : f32
    %28 = vector.broadcast %cst_19 : f32 to vector<16x16xf32>
    %29 = arith.mulf %28, %25 : vector<16x16xf32>
    %30 = arith.select %27, %25, %29 : vector<16x16xi1>, vector<16x16xf32>
    %31 = arith.addf %30, %6 : vector<16x16xf32>
    %cst_20 = arith.constant dense<0xFF800000> : vector<16xf32>
    %32 = vector.multi_reduction <maximumf>, %31, %cst_20 [1] : vector<16x16xf32> to vector<16xf32>
    %33 = vector.shape_cast %32 : vector<16xf32> to vector<16x1xf32>
    %34 = vector.broadcast %33 : vector<16x1xf32> to vector<16x16xf32>
    %35 = arith.subf %31, %34 : vector<16x16xf32>
    %36 = math.exp %35 : vector<16x16xf32>
    %cst_21 = arith.constant dense<0.000000e+00> : vector<16xf32>
    %37 = vector.multi_reduction <add>, %36, %cst_21 [1] : vector<16x16xf32> to vector<16xf32>
    %38 = vector.shape_cast %37 : vector<16xf32> to vector<16x1xf32>
    %39 = tpu.reciprocal %38 {approx = true} : vector<16x1xf32> -> vector<16x1xf32>
    %40 = arith.mulf %12, %39 : vector<16x1xf32>
    %41 = arith.truncf %36 : vector<16x16xf32> to vector<16x16xbf16>
    %cst_22 = arith.constant dense<0.000000e+00> : vector<16x32xf32>
    %42 = tpu.matmul %41, %16, %cst_22 {dimension_numbers = #tpu.dot_dimension_numbers<[1], [0], [0], [1], [0, 0, 1, 1], [], []>} : vector<16x16xbf16>, vector<16x32xbf16>, vector<16x32xf32> -> vector<16x32xf32>
    %c0_23 = arith.constant 0 : index
    %c0_24 = arith.constant 0 : index
    %43 = vector.load %arg15[%c0_23, %c0_24] : memref<4x32xf32, #tpu.memory_space<vmem>>, vector<1x32xf32>
    %44 = vector.broadcast %40 : vector<16x1xf32> to vector<16x32xf32>
    %45 = vector.broadcast %43 : vector<1x32xf32> to vector<16x32xf32>
    %46 = arith.mulf %44, %45 : vector<16x32xf32>
    %47 = arith.mulf %42, %46 : vector<16x32xf32>
    %48 = arith.addf %20, %47 : vector<16x32xf32>
    %49 = vector.extract_strided_slice %4 {offsets = [0, 1], sizes = [16, 1], strides = [1, 1]} : vector<16x4xf32> to vector<16x1xf32>
    %50 = vector.extract_strided_slice %19 {offsets = [1, 0], sizes = [1, 16], strides = [1, 1]} : vector<4x16xf32> to vector<1x16xf32>
    %51 = vector.broadcast %49 : vector<16x1xf32> to vector<16x16xf32>
    %52 = vector.broadcast %50 : vector<1x16xf32> to vector<16x16xf32>
    %53 = arith.addf %51, %52 : vector<16x16xf32>
    %cst_25 = arith.constant 0.000000e+00 : f32
    %54 = vector.broadcast %cst_25 : f32 to vector<16x16xf32>
    %55 = arith.cmpf oge, %53, %54 : vector<16x16xf32>
    %cst_26 = arith.constant 2.000000e-01 : f32
    %56 = vector.broadcast %cst_26 : f32 to vector<16x16xf32>
    %57 = arith.mulf %56, %53 : vector<16x16xf32>
    %58 = arith.select %55, %53, %57 : vector<16x16xi1>, vector<16x16xf32>
    %59 = arith.addf %58, %6 : vector<16x16xf32>
    %cst_27 = arith.constant dense<0xFF800000> : vector<16xf32>
    %60 = vector.multi_reduction <maximumf>, %59, %cst_27 [1] : vector<16x16xf32> to vector<16xf32>
    %61 = vector.shape_cast %60 : vector<16xf32> to vector<16x1xf32>
    %62 = vector.broadcast %61 : vector<16x1xf32> to vector<16x16xf32>
    %63 = arith.subf %59, %62 : vector<16x16xf32>
    %64 = math.exp %63 : vector<16x16xf32>
    %cst_28 = arith.constant dense<0.000000e+00> : vector<16xf32>
    %65 = vector.multi_reduction <add>, %64, %cst_28 [1] : vector<16x16xf32> to vector<16xf32>
    %66 = vector.shape_cast %65 : vector<16xf32> to vector<16x1xf32>
    %67 = tpu.reciprocal %66 {approx = true} : vector<16x1xf32> -> vector<16x1xf32>
    %68 = arith.mulf %12, %67 : vector<16x1xf32>
    %69 = arith.truncf %64 : vector<16x16xf32> to vector<16x16xbf16>
    %cst_29 = arith.constant dense<0.000000e+00> : vector<16x32xf32>
    %70 = tpu.matmul %69, %16, %cst_29 {dimension_numbers = #tpu.dot_dimension_numbers<[1], [0], [0], [1], [0, 0, 1, 1], [], []>} : vector<16x16xbf16>, vector<16x32xbf16>, vector<16x32xf32> -> vector<16x32xf32>
    %c1 = arith.constant 1 : index
    %c0_30 = arith.constant 0 : index
    %71 = vector.load %arg15[%c1, %c0_30] : memref<4x32xf32, #tpu.memory_space<vmem>>, vector<1x32xf32>
    %72 = vector.broadcast %68 : vector<16x1xf32> to vector<16x32xf32>
    %73 = vector.broadcast %71 : vector<1x32xf32> to vector<16x32xf32>
    %74 = arith.mulf %72, %73 : vector<16x32xf32>
    %75 = arith.mulf %70, %74 : vector<16x32xf32>
    %76 = arith.addf %48, %75 : vector<16x32xf32>
    %77 = vector.extract_strided_slice %4 {offsets = [0, 2], sizes = [16, 1], strides = [1, 1]} : vector<16x4xf32> to vector<16x1xf32>
    %78 = vector.extract_strided_slice %19 {offsets = [2, 0], sizes = [1, 16], strides = [1, 1]} : vector<4x16xf32> to vector<1x16xf32>
    %79 = vector.broadcast %77 : vector<16x1xf32> to vector<16x16xf32>
    %80 = vector.broadcast %78 : vector<1x16xf32> to vector<16x16xf32>
    %81 = arith.addf %79, %80 : vector<16x16xf32>
    %cst_31 = arith.constant 0.000000e+00 : f32
    %82 = vector.broadcast %cst_31 : f32 to vector<16x16xf32>
    %83 = arith.cmpf oge, %81, %82 : vector<16x16xf32>
    %cst_32 = arith.constant 2.000000e-01 : f32
    %84 = vector.broadcast %cst_32 : f32 to vector<16x16xf32>
    %85 = arith.mulf %84, %81 : vector<16x16xf32>
    %86 = arith.select %83, %81, %85 : vector<16x16xi1>, vector<16x16xf32>
    %87 = arith.addf %86, %6 : vector<16x16xf32>
    %cst_33 = arith.constant dense<0xFF800000> : vector<16xf32>
    %88 = vector.multi_reduction <maximumf>, %87, %cst_33 [1] : vector<16x16xf32> to vector<16xf32>
    %89 = vector.shape_cast %88 : vector<16xf32> to vector<16x1xf32>
    %90 = vector.broadcast %89 : vector<16x1xf32> to vector<16x16xf32>
    %91 = arith.subf %87, %90 : vector<16x16xf32>
    %92 = math.exp %91 : vector<16x16xf32>
    %cst_34 = arith.constant dense<0.000000e+00> : vector<16xf32>
    %93 = vector.multi_reduction <add>, %92, %cst_34 [1] : vector<16x16xf32> to vector<16xf32>
    %94 = vector.shape_cast %93 : vector<16xf32> to vector<16x1xf32>
    %95 = tpu.reciprocal %94 {approx = true} : vector<16x1xf32> -> vector<16x1xf32>
    %96 = arith.mulf %12, %95 : vector<16x1xf32>
    %97 = arith.truncf %92 : vector<16x16xf32> to vector<16x16xbf16>
    %cst_35 = arith.constant dense<0.000000e+00> : vector<16x32xf32>
    %98 = tpu.matmul %97, %16, %cst_35 {dimension_numbers = #tpu.dot_dimension_numbers<[1], [0], [0], [1], [0, 0, 1, 1], [], []>} : vector<16x16xbf16>, vector<16x32xbf16>, vector<16x32xf32> -> vector<16x32xf32>
    %c2 = arith.constant 2 : index
    %c0_36 = arith.constant 0 : index
    %99 = vector.load %arg15[%c2, %c0_36] : memref<4x32xf32, #tpu.memory_space<vmem>>, vector<1x32xf32>
    %100 = vector.broadcast %96 : vector<16x1xf32> to vector<16x32xf32>
    %101 = vector.broadcast %99 : vector<1x32xf32> to vector<16x32xf32>
    %102 = arith.mulf %100, %101 : vector<16x32xf32>
    %103 = arith.mulf %98, %102 : vector<16x32xf32>
    %104 = arith.addf %76, %103 : vector<16x32xf32>
    %105 = vector.extract_strided_slice %4 {offsets = [0, 3], sizes = [16, 1], strides = [1, 1]} : vector<16x4xf32> to vector<16x1xf32>
    %106 = vector.extract_strided_slice %19 {offsets = [3, 0], sizes = [1, 16], strides = [1, 1]} : vector<4x16xf32> to vector<1x16xf32>
    %107 = vector.broadcast %105 : vector<16x1xf32> to vector<16x16xf32>
    %108 = vector.broadcast %106 : vector<1x16xf32> to vector<16x16xf32>
    %109 = arith.addf %107, %108 : vector<16x16xf32>
    %cst_37 = arith.constant 0.000000e+00 : f32
    %110 = vector.broadcast %cst_37 : f32 to vector<16x16xf32>
    %111 = arith.cmpf oge, %109, %110 : vector<16x16xf32>
    %cst_38 = arith.constant 2.000000e-01 : f32
    %112 = vector.broadcast %cst_38 : f32 to vector<16x16xf32>
    %113 = arith.mulf %112, %109 : vector<16x16xf32>
    %114 = arith.select %111, %109, %113 : vector<16x16xi1>, vector<16x16xf32>
    %115 = arith.addf %114, %6 : vector<16x16xf32>
    %cst_39 = arith.constant dense<0xFF800000> : vector<16xf32>
    %116 = vector.multi_reduction <maximumf>, %115, %cst_39 [1] : vector<16x16xf32> to vector<16xf32>
    %117 = vector.shape_cast %116 : vector<16xf32> to vector<16x1xf32>
    %118 = vector.broadcast %117 : vector<16x1xf32> to vector<16x16xf32>
    %119 = arith.subf %115, %118 : vector<16x16xf32>
    %120 = math.exp %119 : vector<16x16xf32>
    %cst_40 = arith.constant dense<0.000000e+00> : vector<16xf32>
    %121 = vector.multi_reduction <add>, %120, %cst_40 [1] : vector<16x16xf32> to vector<16xf32>
    %122 = vector.shape_cast %121 : vector<16xf32> to vector<16x1xf32>
    %123 = tpu.reciprocal %122 {approx = true} : vector<16x1xf32> -> vector<16x1xf32>
    %124 = arith.mulf %12, %123 : vector<16x1xf32>
    %125 = arith.truncf %120 : vector<16x16xf32> to vector<16x16xbf16>
    %cst_41 = arith.constant dense<0.000000e+00> : vector<16x32xf32>
    %126 = tpu.matmul %125, %16, %cst_41 {dimension_numbers = #tpu.dot_dimension_numbers<[1], [0], [0], [1], [0, 0, 1, 1], [], []>} : vector<16x16xbf16>, vector<16x32xbf16>, vector<16x32xf32> -> vector<16x32xf32>
    %c3 = arith.constant 3 : index
    %c0_42 = arith.constant 0 : index
    %127 = vector.load %arg15[%c3, %c0_42] : memref<4x32xf32, #tpu.memory_space<vmem>>, vector<1x32xf32>
    %128 = vector.broadcast %124 : vector<16x1xf32> to vector<16x32xf32>
    %129 = vector.broadcast %127 : vector<1x32xf32> to vector<16x32xf32>
    %130 = arith.mulf %128, %129 : vector<16x32xf32>
    %131 = arith.mulf %126, %130 : vector<16x32xf32>
    %132 = arith.addf %104, %131 : vector<16x32xf32>
    %133 = arith.addf %132, %3 : vector<16x32xf32>
    %c0_43 = arith.constant 0 : index
    %c0_44 = arith.constant 0 : index
    %134 = vector.load %arg8[%c0_43, %c0_44] : memref<1x32xf32, #tpu.memory_space<vmem>>, vector<1x32xf32>
    %135 = vector.broadcast %134 : vector<1x32xf32> to vector<16x32xf32>
    %136 = arith.addf %133, %135 : vector<16x32xf32>
    %cst_45 = arith.constant 0.000000e+00 : f32
    %137 = vector.broadcast %cst_45 : f32 to vector<16x32xf32>
    %138 = arith.cmpf oge, %136, %137 : vector<16x32xf32>
    %cst_46 = arith.constant 0.00999999977 : f32
    %139 = vector.broadcast %cst_46 : f32 to vector<16x32xf32>
    %140 = arith.mulf %139, %136 : vector<16x32xf32>
    %141 = arith.select %138, %136, %140 : vector<16x32xi1>, vector<16x32xf32>
    %142 = vector.extract_strided_slice %2 {offsets = [0, 128], sizes = [16, 32], strides = [1, 1]} : vector<16x256xf32> to vector<16x32xf32>
    %143 = vector.extract_strided_slice %2 {offsets = [0, 160], sizes = [16, 4], strides = [1, 1]} : vector<16x256xf32> to vector<16x4xf32>
    %c0_47 = arith.constant 0 : index
    %c0_48 = arith.constant 0 : index
    %144 = vector.load %arg3[%c0_47, %c0_48] : memref<16x8xbf16, #tpu.memory_space<vmem>>, vector<16x8xbf16>
    %145 = arith.extf %144 : vector<16x8xbf16> to vector<16x8xf32>
    %cst_49 = arith.constant dense<0xFF800000> : vector<16xf32>
    %146 = vector.multi_reduction <maximumf>, %145, %cst_49 [1] : vector<16x8xf32> to vector<16xf32>
    %147 = vector.shape_cast %146 : vector<16xf32> to vector<16x1xf32>
    %cst_50 = arith.constant -1.000000e+20 : f32
    %148 = vector.broadcast %cst_50 : f32 to vector<16x1xf32>
    %149 = arith.cmpf ogt, %147, %148 : vector<16x1xf32>
    %150 = arith.extui %149 : vector<16x1xi1> to vector<16x1xi32>
    %151 = arith.sitofp %150 : vector<16x1xi32> to vector<16x1xf32>
    %c0_51 = arith.constant 0 : index
    %c0_52 = arith.constant 0 : index
    %152 = vector.load %arg9[%c0_51, %c0_52] : memref<8x8xbf16, #tpu.memory_space<vmem>>, vector<8x8xbf16>
    %c0_53 = arith.constant 0 : index
    %c0_54 = arith.constant 0 : index
    %153 = vector.load %arg11[%c0_53, %c0_54] : memref<8x32xbf16, #tpu.memory_space<vmem>>, vector<8x32xbf16>
    %cst_55 = arith.constant dense<0.000000e+00> : vector<8x32xf32>
    %154 = tpu.matmul %152, %153, %cst_55 {dimension_numbers = #tpu.dot_dimension_numbers<[1], [0], [0], [1], [0, 0, 1, 1], [], []>} : vector<8x8xbf16>, vector<8x32xbf16>, vector<8x32xf32> -> vector<8x32xf32>
    %155 = arith.truncf %154 : vector<8x32xf32> to vector<8x32xbf16>
    %c0_56 = arith.constant 0 : index
    %c0_57 = arith.constant 0 : index
    %156 = vector.load %arg12[%c0_56, %c0_57] : memref<4x8xbf16, #tpu.memory_space<vmem>>, vector<4x8xbf16>
    %c0_58 = arith.constant 0 : index
    %c0_59 = arith.constant 0 : index
    %157 = vector.load %arg10[%c0_58, %c0_59] : memref<8x8xbf16, #tpu.memory_space<vmem>>, vector<8x8xbf16>
    %cst_60 = arith.constant dense<0.000000e+00> : vector<4x8xf32>
    %158 = tpu.matmul %156, %157, %cst_60 {dimension_numbers = #tpu.dot_dimension_numbers<[1], [0], [0], [1], [0, 0, 1, 1], [], []>} : vector<4x8xbf16>, vector<8x8xbf16>, vector<4x8xf32> -> vector<4x8xf32>
    %cst_61 = arith.constant 0.000000e+00 : f32
    %159 = vector.broadcast %cst_61 : f32 to vector<16x32xf32>
    %160 = vector.extract_strided_slice %143 {offsets = [0, 0], sizes = [16, 1], strides = [1, 1]} : vector<16x4xf32> to vector<16x1xf32>
    %161 = vector.extract_strided_slice %158 {offsets = [0, 0], sizes = [1, 8], strides = [1, 1]} : vector<4x8xf32> to vector<1x8xf32>
    %162 = vector.broadcast %160 : vector<16x1xf32> to vector<16x8xf32>
    %163 = vector.broadcast %161 : vector<1x8xf32> to vector<16x8xf32>
    %164 = arith.addf %162, %163 : vector<16x8xf32>
    %cst_62 = arith.constant 0.000000e+00 : f32
    %165 = vector.broadcast %cst_62 : f32 to vector<16x8xf32>
    %166 = arith.cmpf oge, %164, %165 : vector<16x8xf32>
    %cst_63 = arith.constant 2.000000e-01 : f32
    %167 = vector.broadcast %cst_63 : f32 to vector<16x8xf32>
    %168 = arith.mulf %167, %164 : vector<16x8xf32>
    %169 = arith.select %166, %164, %168 : vector<16x8xi1>, vector<16x8xf32>
    %170 = arith.addf %169, %145 : vector<16x8xf32>
    %cst_64 = arith.constant dense<0xFF800000> : vector<16xf32>
    %171 = vector.multi_reduction <maximumf>, %170, %cst_64 [1] : vector<16x8xf32> to vector<16xf32>
    %172 = vector.shape_cast %171 : vector<16xf32> to vector<16x1xf32>
    %173 = vector.broadcast %172 : vector<16x1xf32> to vector<16x8xf32>
    %174 = arith.subf %170, %173 : vector<16x8xf32>
    %175 = math.exp %174 : vector<16x8xf32>
    %cst_65 = arith.constant dense<0.000000e+00> : vector<16xf32>
    %176 = vector.multi_reduction <add>, %175, %cst_65 [1] : vector<16x8xf32> to vector<16xf32>
    %177 = vector.shape_cast %176 : vector<16xf32> to vector<16x1xf32>
    %178 = tpu.reciprocal %177 {approx = true} : vector<16x1xf32> -> vector<16x1xf32>
    %179 = arith.mulf %151, %178 : vector<16x1xf32>
    %180 = arith.truncf %175 : vector<16x8xf32> to vector<16x8xbf16>
    %cst_66 = arith.constant dense<0.000000e+00> : vector<16x32xf32>
    %181 = tpu.matmul %180, %155, %cst_66 {dimension_numbers = #tpu.dot_dimension_numbers<[1], [0], [0], [1], [0, 0, 1, 1], [], []>} : vector<16x8xbf16>, vector<8x32xbf16>, vector<16x32xf32> -> vector<16x32xf32>
    %c0_67 = arith.constant 0 : index
    %c0_68 = arith.constant 0 : index
    %182 = vector.load %arg15[%c0_67, %c0_68] : memref<4x32xf32, #tpu.memory_space<vmem>>, vector<1x32xf32>
    %183 = vector.broadcast %179 : vector<16x1xf32> to vector<16x32xf32>
    %184 = vector.broadcast %182 : vector<1x32xf32> to vector<16x32xf32>
    %185 = arith.mulf %183, %184 : vector<16x32xf32>
    %186 = arith.mulf %181, %185 : vector<16x32xf32>
    %187 = arith.addf %159, %186 : vector<16x32xf32>
    %188 = vector.extract_strided_slice %143 {offsets = [0, 1], sizes = [16, 1], strides = [1, 1]} : vector<16x4xf32> to vector<16x1xf32>
    %189 = vector.extract_strided_slice %158 {offsets = [1, 0], sizes = [1, 8], strides = [1, 1]} : vector<4x8xf32> to vector<1x8xf32>
    %190 = vector.broadcast %188 : vector<16x1xf32> to vector<16x8xf32>
    %191 = vector.broadcast %189 : vector<1x8xf32> to vector<16x8xf32>
    %192 = arith.addf %190, %191 : vector<16x8xf32>
    %cst_69 = arith.constant 0.000000e+00 : f32
    %193 = vector.broadcast %cst_69 : f32 to vector<16x8xf32>
    %194 = arith.cmpf oge, %192, %193 : vector<16x8xf32>
    %cst_70 = arith.constant 2.000000e-01 : f32
    %195 = vector.broadcast %cst_70 : f32 to vector<16x8xf32>
    %196 = arith.mulf %195, %192 : vector<16x8xf32>
    %197 = arith.select %194, %192, %196 : vector<16x8xi1>, vector<16x8xf32>
    %198 = arith.addf %197, %145 : vector<16x8xf32>
    %cst_71 = arith.constant dense<0xFF800000> : vector<16xf32>
    %199 = vector.multi_reduction <maximumf>, %198, %cst_71 [1] : vector<16x8xf32> to vector<16xf32>
    %200 = vector.shape_cast %199 : vector<16xf32> to vector<16x1xf32>
    %201 = vector.broadcast %200 : vector<16x1xf32> to vector<16x8xf32>
    %202 = arith.subf %198, %201 : vector<16x8xf32>
    %203 = math.exp %202 : vector<16x8xf32>
    %cst_72 = arith.constant dense<0.000000e+00> : vector<16xf32>
    %204 = vector.multi_reduction <add>, %203, %cst_72 [1] : vector<16x8xf32> to vector<16xf32>
    %205 = vector.shape_cast %204 : vector<16xf32> to vector<16x1xf32>
    %206 = tpu.reciprocal %205 {approx = true} : vector<16x1xf32> -> vector<16x1xf32>
    %207 = arith.mulf %151, %206 : vector<16x1xf32>
    %208 = arith.truncf %203 : vector<16x8xf32> to vector<16x8xbf16>
    %cst_73 = arith.constant dense<0.000000e+00> : vector<16x32xf32>
    %209 = tpu.matmul %208, %155, %cst_73 {dimension_numbers = #tpu.dot_dimension_numbers<[1], [0], [0], [1], [0, 0, 1, 1], [], []>} : vector<16x8xbf16>, vector<8x32xbf16>, vector<16x32xf32> -> vector<16x32xf32>
    %c1_74 = arith.constant 1 : index
    %c0_75 = arith.constant 0 : index
    %210 = vector.load %arg15[%c1_74, %c0_75] : memref<4x32xf32, #tpu.memory_space<vmem>>, vector<1x32xf32>
    %211 = vector.broadcast %207 : vector<16x1xf32> to vector<16x32xf32>
    %212 = vector.broadcast %210 : vector<1x32xf32> to vector<16x32xf32>
    %213 = arith.mulf %211, %212 : vector<16x32xf32>
    %214 = arith.mulf %209, %213 : vector<16x32xf32>
    %215 = arith.addf %187, %214 : vector<16x32xf32>
    %216 = vector.extract_strided_slice %143 {offsets = [0, 2], sizes = [16, 1], strides = [1, 1]} : vector<16x4xf32> to vector<16x1xf32>
    %217 = vector.extract_strided_slice %158 {offsets = [2, 0], sizes = [1, 8], strides = [1, 1]} : vector<4x8xf32> to vector<1x8xf32>
    %218 = vector.broadcast %216 : vector<16x1xf32> to vector<16x8xf32>
    %219 = vector.broadcast %217 : vector<1x8xf32> to vector<16x8xf32>
    %220 = arith.addf %218, %219 : vector<16x8xf32>
    %cst_76 = arith.constant 0.000000e+00 : f32
    %221 = vector.broadcast %cst_76 : f32 to vector<16x8xf32>
    %222 = arith.cmpf oge, %220, %221 : vector<16x8xf32>
    %cst_77 = arith.constant 2.000000e-01 : f32
    %223 = vector.broadcast %cst_77 : f32 to vector<16x8xf32>
    %224 = arith.mulf %223, %220 : vector<16x8xf32>
    %225 = arith.select %222, %220, %224 : vector<16x8xi1>, vector<16x8xf32>
    %226 = arith.addf %225, %145 : vector<16x8xf32>
    %cst_78 = arith.constant dense<0xFF800000> : vector<16xf32>
    %227 = vector.multi_reduction <maximumf>, %226, %cst_78 [1] : vector<16x8xf32> to vector<16xf32>
    %228 = vector.shape_cast %227 : vector<16xf32> to vector<16x1xf32>
    %229 = vector.broadcast %228 : vector<16x1xf32> to vector<16x8xf32>
    %230 = arith.subf %226, %229 : vector<16x8xf32>
    %231 = math.exp %230 : vector<16x8xf32>
    %cst_79 = arith.constant dense<0.000000e+00> : vector<16xf32>
    %232 = vector.multi_reduction <add>, %231, %cst_79 [1] : vector<16x8xf32> to vector<16xf32>
    %233 = vector.shape_cast %232 : vector<16xf32> to vector<16x1xf32>
    %234 = tpu.reciprocal %233 {approx = true} : vector<16x1xf32> -> vector<16x1xf32>
    %235 = arith.mulf %151, %234 : vector<16x1xf32>
    %236 = arith.truncf %231 : vector<16x8xf32> to vector<16x8xbf16>
    %cst_80 = arith.constant dense<0.000000e+00> : vector<16x32xf32>
    %237 = tpu.matmul %236, %155, %cst_80 {dimension_numbers = #tpu.dot_dimension_numbers<[1], [0], [0], [1], [0, 0, 1, 1], [], []>} : vector<16x8xbf16>, vector<8x32xbf16>, vector<16x32xf32> -> vector<16x32xf32>
    %c2_81 = arith.constant 2 : index
    %c0_82 = arith.constant 0 : index
    %238 = vector.load %arg15[%c2_81, %c0_82] : memref<4x32xf32, #tpu.memory_space<vmem>>, vector<1x32xf32>
    %239 = vector.broadcast %235 : vector<16x1xf32> to vector<16x32xf32>
    %240 = vector.broadcast %238 : vector<1x32xf32> to vector<16x32xf32>
    %241 = arith.mulf %239, %240 : vector<16x32xf32>
    %242 = arith.mulf %237, %241 : vector<16x32xf32>
    %243 = arith.addf %215, %242 : vector<16x32xf32>
    %244 = vector.extract_strided_slice %143 {offsets = [0, 3], sizes = [16, 1], strides = [1, 1]} : vector<16x4xf32> to vector<16x1xf32>
    %245 = vector.extract_strided_slice %158 {offsets = [3, 0], sizes = [1, 8], strides = [1, 1]} : vector<4x8xf32> to vector<1x8xf32>
    %246 = vector.broadcast %244 : vector<16x1xf32> to vector<16x8xf32>
    %247 = vector.broadcast %245 : vector<1x8xf32> to vector<16x8xf32>
    %248 = arith.addf %246, %247 : vector<16x8xf32>
    %cst_83 = arith.constant 0.000000e+00 : f32
    %249 = vector.broadcast %cst_83 : f32 to vector<16x8xf32>
    %250 = arith.cmpf oge, %248, %249 : vector<16x8xf32>
    %cst_84 = arith.constant 2.000000e-01 : f32
    %251 = vector.broadcast %cst_84 : f32 to vector<16x8xf32>
    %252 = arith.mulf %251, %248 : vector<16x8xf32>
    %253 = arith.select %250, %248, %252 : vector<16x8xi1>, vector<16x8xf32>
    %254 = arith.addf %253, %145 : vector<16x8xf32>
    %cst_85 = arith.constant dense<0xFF800000> : vector<16xf32>
    %255 = vector.multi_reduction <maximumf>, %254, %cst_85 [1] : vector<16x8xf32> to vector<16xf32>
    %256 = vector.shape_cast %255 : vector<16xf32> to vector<16x1xf32>
    %257 = vector.broadcast %256 : vector<16x1xf32> to vector<16x8xf32>
    %258 = arith.subf %254, %257 : vector<16x8xf32>
    %259 = math.exp %258 : vector<16x8xf32>
    %cst_86 = arith.constant dense<0.000000e+00> : vector<16xf32>
    %260 = vector.multi_reduction <add>, %259, %cst_86 [1] : vector<16x8xf32> to vector<16xf32>
    %261 = vector.shape_cast %260 : vector<16xf32> to vector<16x1xf32>
    %262 = tpu.reciprocal %261 {approx = true} : vector<16x1xf32> -> vector<16x1xf32>
    %263 = arith.mulf %151, %262 : vector<16x1xf32>
    %264 = arith.truncf %259 : vector<16x8xf32> to vector<16x8xbf16>
    %cst_87 = arith.constant dense<0.000000e+00> : vector<16x32xf32>
    %265 = tpu.matmul %264, %155, %cst_87 {dimension_numbers = #tpu.dot_dimension_numbers<[1], [0], [0], [1], [0, 0, 1, 1], [], []>} : vector<16x8xbf16>, vector<8x32xbf16>, vector<16x32xf32> -> vector<16x32xf32>
    %c3_88 = arith.constant 3 : index
    %c0_89 = arith.constant 0 : index
    %266 = vector.load %arg15[%c3_88, %c0_89] : memref<4x32xf32, #tpu.memory_space<vmem>>, vector<1x32xf32>
    %267 = vector.broadcast %263 : vector<16x1xf32> to vector<16x32xf32>
    %268 = vector.broadcast %266 : vector<1x32xf32> to vector<16x32xf32>
    %269 = arith.mulf %267, %268 : vector<16x32xf32>
    %270 = arith.mulf %265, %269 : vector<16x32xf32>
    %271 = arith.addf %243, %270 : vector<16x32xf32>
    %272 = arith.addf %271, %142 : vector<16x32xf32>
    %c0_90 = arith.constant 0 : index
    %c0_91 = arith.constant 0 : index
    %273 = vector.load %arg13[%c0_90, %c0_91] : memref<1x32xf32, #tpu.memory_space<vmem>>, vector<1x32xf32>
    %274 = vector.broadcast %273 : vector<1x32xf32> to vector<16x32xf32>
    %275 = arith.addf %272, %274 : vector<16x32xf32>
    %cst_92 = arith.constant 0.000000e+00 : f32
    %276 = vector.broadcast %cst_92 : f32 to vector<16x32xf32>
    %277 = arith.cmpf oge, %275, %276 : vector<16x32xf32>
    %cst_93 = arith.constant 0.00999999977 : f32
    %278 = vector.broadcast %cst_93 : f32 to vector<16x32xf32>
    %279 = arith.mulf %278, %275 : vector<16x32xf32>
    %280 = arith.select %277, %275, %279 : vector<16x32xi1>, vector<16x32xf32>
    %c0_94 = arith.constant 0 : index
    %c0_95 = arith.constant 0 : index
    %c0_96 = arith.constant 0 : index
    %281 = vector.load %arg19[%c0_94, %c0_95, %c0_96] : memref<2x16x32xf32, #tpu.memory_space<vmem>>, vector<1x16x32xf32>
    %282 = vector.shape_cast %281 : vector<1x16x32xf32> to vector<16x32xf32>
    %283 = vector.shape_cast %141 : vector<16x32xf32> to vector<1x16x32xf32>
    tpu.vector_store %arg19[%c0_94, %c0_95, %c0_96], %283 {strides = array<i32>} : memref<2x16x32xf32, #tpu.memory_space<vmem>>, vector<1x16x32xf32>,
    %c1_97 = arith.constant 1 : index
    %c0_98 = arith.constant 0 : index
    %c0_99 = arith.constant 0 : index
    %284 = vector.load %arg19[%c1_97, %c0_98, %c0_99] : memref<2x16x32xf32, #tpu.memory_space<vmem>>, vector<1x16x32xf32>
    %285 = vector.shape_cast %284 : vector<1x16x32xf32> to vector<16x32xf32>
    %286 = vector.shape_cast %280 : vector<16x32xf32> to vector<1x16x32xf32>
    tpu.vector_store %arg19[%c1_97, %c0_98, %c0_99], %286 {strides = array<i32>} : memref<2x16x32xf32, #tpu.memory_space<vmem>>, vector<1x16x32xf32>,
    %c0_100 = arith.constant 0 : index
    %c0_101 = arith.constant 0 : index
    %287 = vector.load %arg16[%c0_100, %c0_101] : memref<32x128xf32, #tpu.memory_space<vmem>>, vector<32x128xf32>
    %cst_102 = arith.constant dense<0.000000e+00> : vector<16x128xf32>
    %288 = tpu.matmul %141, %287, %cst_102 {dimension_numbers = #tpu.dot_dimension_numbers<[1], [0], [0], [1], [0, 0, 1, 1], [], []>} : vector<16x32xf32>, vector<32x128xf32>, vector<16x128xf32> -> vector<16x128xf32>
    %c0_103 = arith.constant 0 : index
    %c0_104 = arith.constant 0 : index
    %289 = vector.load %arg17[%c0_103, %c0_104] : memref<1x128xf32, #tpu.memory_space<vmem>>, vector<1x128xf32>
    %290 = vector.broadcast %289 : vector<1x128xf32> to vector<16x128xf32>
    %291 = arith.addf %288, %290 : vector<16x128xf32>
    %292 = math.tanh %291 : vector<16x128xf32>
    %c0_105 = arith.constant 0 : index
    %c0_106 = arith.constant 0 : index
    %293 = vector.load %arg16[%c0_105, %c0_106] : memref<32x128xf32, #tpu.memory_space<vmem>>, vector<32x128xf32>
    %cst_107 = arith.constant dense<0.000000e+00> : vector<16x128xf32>
    %294 = tpu.matmul %280, %293, %cst_107 {dimension_numbers = #tpu.dot_dimension_numbers<[1], [0], [0], [1], [0, 0, 1, 1], [], []>} : vector<16x32xf32>, vector<32x128xf32>, vector<16x128xf32> -> vector<16x128xf32>
    %c0_108 = arith.constant 0 : index
    %c0_109 = arith.constant 0 : index
    %295 = vector.load %arg17[%c0_108, %c0_109] : memref<1x128xf32, #tpu.memory_space<vmem>>, vector<1x128xf32>
    %296 = vector.broadcast %295 : vector<1x128xf32> to vector<16x128xf32>
    %297 = arith.addf %294, %296 : vector<16x128xf32>
    %298 = math.tanh %297 : vector<16x128xf32>
    %cst_110 = arith.constant dense<0.000000e+00> : vector<128xf32>
    %299 = vector.multi_reduction <add>, %292, %cst_110 [0] : vector<16x128xf32> to vector<128xf32>
    %300 = vector.shape_cast %299 : vector<128xf32> to vector<1x128xf32>
    %c0_111 = arith.constant 0 : index
    %c0_112 = arith.constant 0 : index
    %301 = vector.load %arg18[%c0_111, %c0_112] : memref<128x1xf32, #tpu.memory_space<vmem>>, vector<128x1xf32>
    %cst_113 = arith.constant dense<0.000000e+00> : vector<1x1xf32>
    %302 = tpu.matmul %300, %301, %cst_113 {dimension_numbers = #tpu.dot_dimension_numbers<[1], [0], [0], [1], [0, 0, 1, 1], [], []>} : vector<1x128xf32>, vector<128x1xf32>, vector<1x1xf32> -> vector<1x1xf32>
    %cst_114 = arith.constant dense<0.000000e+00> : vector<128xf32>
    %303 = vector.multi_reduction <add>, %298, %cst_114 [0] : vector<16x128xf32> to vector<128xf32>
    %304 = vector.shape_cast %303 : vector<128xf32> to vector<1x128xf32>
    %c0_115 = arith.constant 0 : index
    %c0_116 = arith.constant 0 : index
    %305 = vector.load %arg18[%c0_115, %c0_116] : memref<128x1xf32, #tpu.memory_space<vmem>>, vector<128x1xf32>
    %cst_117 = arith.constant dense<0.000000e+00> : vector<1x1xf32>
    %306 = tpu.matmul %304, %305, %cst_117 {dimension_numbers = #tpu.dot_dimension_numbers<[1], [0], [0], [1], [0, 0, 1, 1], [], []>} : vector<1x128xf32>, vector<128x1xf32>, vector<1x1xf32> -> vector<1x1xf32>
    %307 = tpu.iota {dimensions = array<i32: 0>} : vector<8x128xi32>
    %308 = tpu.iota {dimensions = array<i32: 1>} : vector<8x128xi32>
    %c0_i32 = arith.constant 0 : i32
    %309 = vector.broadcast %c0_i32 : i32 to vector<8x128xi32>
    %310 = arith.cmpi eq, %307, %309 : vector<8x128xi32>
    %c0_i32_118 = arith.constant 0 : i32
    %311 = vector.broadcast %c0_i32_118 : i32 to vector<8x128xi32>
    %312 = arith.cmpi eq, %308, %311 : vector<8x128xi32>
    %313 = arith.andi %310, %312 : vector<8x128xi1>
    %cst_119 = arith.constant 0.000000e+00 : f32
    %314 = vector.shape_cast %302 : vector<1x1xf32> to vector<1x1xf32>
    %315 = vector.broadcast %314 : vector<1x1xf32> to vector<8x128xf32>
    %316 = vector.broadcast %cst_119 : f32 to vector<8x128xf32>
    %317 = arith.select %313, %315, %316 : vector<8x128xi1>, vector<8x128xf32>
    %c0_i32_120 = arith.constant 0 : i32
    %318 = vector.broadcast %c0_i32_120 : i32 to vector<8x128xi32>
    %319 = arith.cmpi eq, %307, %318 : vector<8x128xi32>
    %c1_i32 = arith.constant 1 : i32
    %320 = vector.broadcast %c1_i32 : i32 to vector<8x128xi32>
    %321 = arith.cmpi eq, %308, %320 : vector<8x128xi32>
    %322 = arith.andi %319, %321 : vector<8x128xi1>
    %cst_121 = arith.constant 0.000000e+00 : f32
    %323 = vector.shape_cast %306 : vector<1x1xf32> to vector<1x1xf32>
    %324 = vector.broadcast %323 : vector<1x1xf32> to vector<8x128xf32>
    %325 = vector.broadcast %cst_121 : f32 to vector<8x128xf32>
    %326 = arith.select %322, %324, %325 : vector<8x128xi1>, vector<8x128xf32>
    %327 = arith.addf %317, %326 : vector<8x128xf32>
    %328 = vector.shape_cast %327 : vector<8x128xf32> to vector<1x8x128xf32>
    %c0_122 = arith.constant 0 : index
    %c0_123 = arith.constant 0 : index
    %c0_124 = arith.constant 0 : index
    %329 = vector.load %arg20[%c0_122, %c0_123, %c0_124] : memref<1x8x128xf32, #tpu.memory_space<vmem>>, vector<1x8x128xf32>
    tpu.vector_store %arg20[%c0_122, %c0_123, %c0_124], %328 {strides = array<i32>} : memref<1x8x128xf32, #tpu.memory_space<vmem>>, vector<1x8x128xf32>,
    return
  }
  func.func @transform_0(%arg0: i32) -> (i32, i32) {
    %c0_i32 = arith.constant 0 : i32
    %c0_i32_0 = arith.constant 0 : i32
    return %arg0, %c0_i32 : i32, i32
  }
  func.func @transform_1(%arg0: i32) -> (i32, i32) {
    %c0_i32 = arith.constant 0 : i32
    %c0_i32_0 = arith.constant 0 : i32
    return %arg0, %c0_i32 : i32, i32
  }
  func.func @transform_2(%arg0: i32) -> (i32, i32) {
    %c0_i32 = arith.constant 0 : i32
    %c0_i32_0 = arith.constant 0 : i32
    return %arg0, %c0_i32 : i32, i32
  }
  func.func @transform_3(%arg0: i32) -> (i32, i32) {
    %c0_i32 = arith.constant 0 : i32
    %c0_i32_0 = arith.constant 0 : i32
    %c0_i32_1 = arith.constant 0 : i32
    return %c0_i32, %c0_i32_0 : i32, i32
  }
  func.func @transform_4(%arg0: i32) -> (i32, i32) {
    %c0_i32 = arith.constant 0 : i32
    %c0_i32_0 = arith.constant 0 : i32
    %c0_i32_1 = arith.constant 0 : i32
    return %c0_i32, %c0_i32_0 : i32, i32
  }
  func.func @transform_5(%arg0: i32) -> (i32, i32) {
    %c0_i32 = arith.constant 0 : i32
    %c0_i32_0 = arith.constant 0 : i32
    %c0_i32_1 = arith.constant 0 : i32
    return %c0_i32, %c0_i32_0 : i32, i32
  }
  func.func @transform_6(%arg0: i32) -> (i32, i32) {
    %c0_i32 = arith.constant 0 : i32
    %c0_i32_0 = arith.constant 0 : i32
    %c0_i32_1 = arith.constant 0 : i32
    return %c0_i32, %c0_i32_0 : i32, i32
  }
  func.func @transform_7(%arg0: i32) -> (i32, i32) {
    %c0_i32 = arith.constant 0 : i32
    %c0_i32_0 = arith.constant 0 : i32
    %c0_i32_1 = arith.constant 0 : i32
    return %c0_i32, %c0_i32_0 : i32, i32
  }
  func.func @transform_8(%arg0: i32) -> (i32, i32) {
    %c0_i32 = arith.constant 0 : i32
    %c0_i32_0 = arith.constant 0 : i32
    %c0_i32_1 = arith.constant 0 : i32
    return %c0_i32, %c0_i32_0 : i32, i32
  }
  func.func @transform_9(%arg0: i32) -> (i32, i32) {
    %c0_i32 = arith.constant 0 : i32
    %c0_i32_0 = arith.constant 0 : i32
    %c0_i32_1 = arith.constant 0 : i32
    return %c0_i32, %c0_i32_0 : i32, i32
  }
  func.func @transform_10(%arg0: i32) -> (i32, i32) {
    %c0_i32 = arith.constant 0 : i32
    %c0_i32_0 = arith.constant 0 : i32
    %c0_i32_1 = arith.constant 0 : i32
    return %c0_i32, %c0_i32_0 : i32, i32
  }
  func.func @transform_11(%arg0: i32) -> (i32, i32) {
    %c0_i32 = arith.constant 0 : i32
    %c0_i32_0 = arith.constant 0 : i32
    %c0_i32_1 = arith.constant 0 : i32
    return %c0_i32, %c0_i32_0 : i32, i32
  }
  func.func @transform_12(%arg0: i32) -> (i32, i32) {
    %c0_i32 = arith.constant 0 : i32
    %c0_i32_0 = arith.constant 0 : i32
    %c0_i32_1 = arith.constant 0 : i32
    return %c0_i32, %c0_i32_0 : i32, i32
  }
  func.func @transform_13(%arg0: i32) -> (i32, i32) {
    %c0_i32 = arith.constant 0 : i32
    %c0_i32_0 = arith.constant 0 : i32
    %c0_i32_1 = arith.constant 0 : i32
    return %c0_i32, %c0_i32_0 : i32, i32
  }
  func.func @transform_14(%arg0: i32) -> (i32, i32) {
    %c0_i32 = arith.constant 0 : i32
    %c0_i32_0 = arith.constant 0 : i32
    %c0_i32_1 = arith.constant 0 : i32
    return %c0_i32, %c0_i32_0 : i32, i32
  }
  func.func @transform_15(%arg0: i32) -> (i32, i32) {
    %c0_i32 = arith.constant 0 : i32
    %c0_i32_0 = arith.constant 0 : i32
    %c0_i32_1 = arith.constant 0 : i32
    return %c0_i32, %c0_i32_0 : i32, i32
  }
  func.func @transform_16(%arg0: i32) -> (i32, i32) {
    %c0_i32 = arith.constant 0 : i32
    %c0_i32_0 = arith.constant 0 : i32
    %c0_i32_1 = arith.constant 0 : i32
    return %c0_i32, %c0_i32_0 : i32, i32
  }
  func.func @transform_17(%arg0: i32) -> (i32, i32) {
    %c0_i32 = arith.constant 0 : i32
    %c0_i32_0 = arith.constant 0 : i32
    %c0_i32_1 = arith.constant 0 : i32
    return %c0_i32, %c0_i32_0 : i32, i32
  }
  func.func @transform_18(%arg0: i32) -> (i32, i32, i32) {
    %c0_i32 = arith.constant 0 : i32
    %c0_i32_0 = arith.constant 0 : i32
    %c0_i32_1 = arith.constant 0 : i32
    return %c0_i32, %arg0, %c0_i32_0 : i32, i32, i32
  }
  func.func @transform_19(%arg0: i32) -> (i32, i32, i32) {
    %c0_i32 = arith.constant 0 : i32
    %c0_i32_0 = arith.constant 0 : i32
    %c0_i32_1 = arith.constant 0 : i32
    return %arg0, %c0_i32, %c0_i32_0 : i32, i32, i32
  }
}

</mosaic_0001>

<llo_original>
// kernel: tpu_custom_call.1
$region0: #{tpu_custom_call.1}
  #allocation0 [shape = 'u32[]', space=smem, size = 0x4, offset = 0x4, fixed_abs, tag = 'smem constant byte address 0x4 - core index']
  #allocation1 [shape = 'u32[144,128]{1,0:T(1,128)}', space=vmem, size = 0x12000, scoped, tag = 'internal scratch']
  %s0 = inlined_call_operand.vmem [shape: bf16[16,16], index: 0, kind: input, shape index: {}]
  %s1 = inlined_call_operand.vmem [shape: bf16[16,16], index: 1, kind: input, shape index: {}]
  %s2 = inlined_call_operand.vmem [shape: bf16[16,8], index: 2, kind: input, shape index: {}]
  %s3 = inlined_call_operand.vmem [shape: bf16[16,8], index: 3, kind: input, shape index: {}]
  %s4 = inlined_call_operand.vmem [shape: bf16[8,16], index: 4, kind: input, shape index: {}]
  %s5 = inlined_call_operand.vmem [shape: bf16[8,32], index: 5, kind: input, shape index: {}]
  %s6 = inlined_call_operand.vmem [shape: bf16[4,8], index: 6, kind: input, shape index: {}]
  %s7 = inlined_call_operand.vmem [shape: f32[1,32], index: 7, kind: input, shape index: {}]
  %s8 = inlined_call_operand.vmem [shape: bf16[8,8], index: 8, kind: input, shape index: {}]
  %s9 = inlined_call_operand.vmem [shape: bf16[8,8], index: 9, kind: input, shape index: {}]
  %s10 = inlined_call_operand.vmem [shape: bf16[8,32], index: 10, kind: input, shape index: {}]
  %s11 = inlined_call_operand.vmem [shape: bf16[4,8], index: 11, kind: input, shape index: {}]
  %s12 = inlined_call_operand.vmem [shape: f32[1,32], index: 12, kind: input, shape index: {}]
  %s13 = inlined_call_operand.vmem [shape: bf16[16,256], index: 13, kind: input, shape index: {}]
  %s14 = inlined_call_operand.vmem [shape: f32[4,32], index: 14, kind: input, shape index: {}]
  %s15 = inlined_call_operand.vmem [shape: f32[32,128], index: 15, kind: input, shape index: {}]
  %s16 = inlined_call_operand.vmem [shape: f32[1,128], index: 16, kind: input, shape index: {}]
  %s17 = inlined_call_operand.vmem [shape: f32[128,1], index: 17, kind: input, shape index: {}]
  %s18 = inlined_call_operand.hbm [shape: f32[2,16,32], index: 18, kind: output, shape index: {0}]
  %s19 = inlined_call_operand.hbm [shape: f32[1,8,128], index: 19, kind: output, shape index: {1}]
  %20 = xla_tuple %s18, %s19
  %s21 = sld [smem:[#allocation0]]
  $region90: #{tpu_custom_call.1} parent=0
    _
  %s23 = ssub.s32 1, %s21
  %s24 = scalar_select 0, %s23, %s21
  $region1: #{tpu_custom_call.1} parent=0
    #allocation2 [shape = 'u8[16384]{0}', space=vmem, size = 0x4000, scoped, tag = 'output window, operand 0, single buffered']
    #allocation3 [shape = 's32[1]{0}', space=sflag, size = 0x4, scoped, tag = 'scoped memory for tpu_custom_call.1']
    #allocation4 [shape = 'u8[4096]{0}', space=vmem, size = 0x1000, scoped, tag = 'output window, operand 1, single buffered']
    #allocation5 [shape = 's32[1]{0}', space=sflag, size = 0x4, scoped, tag = 'scoped memory for tpu_custom_call.1']
    %25 = vsyncpa [#allocation3], 0
    %26 = vsyncpa [#allocation5], 0
    // Predicated region
    $region2: #{tpu_custom_call.1} parent=1 // pred_check
      _
    $region3: #{tpu_custom_call.1} parent=1 // pred_check_branch
      %28 = sbr.rel (0) target = $region5
    $region4: #{tpu_custom_call.1} parent=1 // pred_region
      _
    $region5: #{tpu_custom_call.1} parent=1 // pred_fallthru
      _
    // Predicated region
    $region6: #{tpu_custom_call.1} parent=1 // pred_check
      _
    $region7: #{tpu_custom_call.1} parent=1 // pred_check_branch
      %30 = sbr.rel (0) target = $region9
    $region8: #{tpu_custom_call.1} parent=1 // pred_region
      _
    $region9: #{tpu_custom_call.1} parent=1 // pred_fallthru
      _
    // Predicated region
    $region10: #{tpu_custom_call.1} parent=1 // pred_check
      _
    $region11: #{tpu_custom_call.1} parent=1 // pred_check_branch
      %32 = sbr.rel (0) target = $region13
    $region12: #{tpu_custom_call.1} parent=1 // pred_region
      _
    $region13: #{tpu_custom_call.1} parent=1 // pred_fallthru
      _
    // Predicated region
    $region14: #{tpu_custom_call.1} parent=1 // pred_check
      _
    $region15: #{tpu_custom_call.1} parent=1 // pred_check_branch
      %34 = sbr.rel (0) target = $region17
    $region16: #{tpu_custom_call.1} parent=1 // pred_region
      _
    $region17: #{tpu_custom_call.1} parent=1 // pred_fallthru
      _
    // Predicated region
    $region18: #{tpu_custom_call.1} parent=1 // pred_check
      _
    $region19: #{tpu_custom_call.1} parent=1 // pred_check_branch
      %36 = sbr.rel (0) target = $region21
    $region20: #{tpu_custom_call.1} parent=1 // pred_region
      _
    $region21: #{tpu_custom_call.1} parent=1 // pred_fallthru
      _
    // Predicated region
    $region22: #{tpu_custom_call.1} parent=1 // pred_check
      _
    $region23: #{tpu_custom_call.1} parent=1 // pred_check_branch
      %38 = sbr.rel (0) target = $region25
    $region24: #{tpu_custom_call.1} parent=1 // pred_region
      _
    $region25: #{tpu_custom_call.1} parent=1 // pred_fallthru
      _
    // Predicated region
    $region26: #{tpu_custom_call.1} parent=1 // pred_check
      _
    $region27: #{tpu_custom_call.1} parent=1 // pred_check_branch
      %40 = sbr.rel (0) target = $region29
    $region28: #{tpu_custom_call.1} parent=1 // pred_region
      _
    $region29: #{tpu_custom_call.1} parent=1 // pred_fallthru
      _
    // Predicated region
    $region30: #{tpu_custom_call.1} parent=1 // pred_check
      _
    $region31: #{tpu_custom_call.1} parent=1 // pred_check_branch
      %42 = sbr.rel (0) target = $region33
    $region32: #{tpu_custom_call.1} parent=1 // pred_region
      _
    $region33: #{tpu_custom_call.1} parent=1 // pred_fallthru
      _
    // Predicated region
    $region34: #{tpu_custom_call.1} parent=1 // pred_check
      _
    $region35: #{tpu_custom_call.1} parent=1 // pred_check_branch
      %44 = sbr.rel (0) target = $region37
    $region36: #{tpu_custom_call.1} parent=1 // pred_region
      _
    $region37: #{tpu_custom_call.1} parent=1 // pred_fallthru
      _
    // Predicated region
    $region38: #{tpu_custom_call.1} parent=1 // pred_check
      _
    $region39: #{tpu_custom_call.1} parent=1 // pred_check_branch
      %46 = sbr.rel (0) target = $region41
    $region40: #{tpu_custom_call.1} parent=1 // pred_region
      _
    $region41: #{tpu_custom_call.1} parent=1 // pred_fallthru
      _
    // Predicated region
    $region42: #{tpu_custom_call.1} parent=1 // pred_check
      _
    $region43: #{tpu_custom_call.1} parent=1 // pred_check_branch
      %48 = sbr.rel (0) target = $region45
    $region44: #{tpu_custom_call.1} parent=1 // pred_region
      _
    $region45: #{tpu_custom_call.1} parent=1 // pred_fallthru
      _
    // Predicated region
    $region46: #{tpu_custom_call.1} parent=1 // pred_check
      _
    $region47: #{tpu_custom_call.1} parent=1 // pred_check_branch
      %50 = sbr.rel (0) target = $region49
    $region48: #{tpu_custom_call.1} parent=1 // pred_region
      _
    $region49: #{tpu_custom_call.1} parent=1 // pred_fallthru
      _
    // Predicated region
    $region50: #{tpu_custom_call.1} parent=1 // pred_check
      _
    $region51: #{tpu_custom_call.1} parent=1 // pred_check_branch
      %52 = sbr.rel (0) target = $region53
    $region52: #{tpu_custom_call.1} parent=1 // pred_region
      _
    $region53: #{tpu_custom_call.1} parent=1 // pred_fallthru
      _
    // Predicated region
    $region54: #{tpu_custom_call.1} parent=1 // pred_check
      _
    $region55: #{tpu_custom_call.1} parent=1 // pred_check_branch
      %54 = sbr.rel (0) target = $region57
    $region56: #{tpu_custom_call.1} parent=1 // pred_region
      _
    $region57: #{tpu_custom_call.1} parent=1 // pred_fallthru
      _
    // Predicated region
    $region58: #{tpu_custom_call.1} parent=1 // pred_check
      _
    $region59: #{tpu_custom_call.1} parent=1 // pred_check_branch
      %56 = sbr.rel (0) target = $region61
    $region60: #{tpu_custom_call.1} parent=1 // pred_region
      _
    $region61: #{tpu_custom_call.1} parent=1 // pred_fallthru
      _
    // Predicated region
    $region62: #{tpu_custom_call.1} parent=1 // pred_check
      _
    $region63: #{tpu_custom_call.1} parent=1 // pred_check_branch
      %58 = sbr.rel (0) target = $region65
    $region64: #{tpu_custom_call.1} parent=1 // pred_region
      _
    $region65: #{tpu_custom_call.1} parent=1 // pred_fallthru
      _
    // Predicated region
    $region66: #{tpu_custom_call.1} parent=1 // pred_check
      _
    $region67: #{tpu_custom_call.1} parent=1 // pred_check_branch
      %60 = sbr.rel (0) target = $region69
    $region68: #{tpu_custom_call.1} parent=1 // pred_region
      _
    $region69: #{tpu_custom_call.1} parent=1 // pred_fallthru
      _
    // Predicated region
    $region70: #{tpu_custom_call.1} parent=1 // pred_check
      _
    $region71: #{tpu_custom_call.1} parent=1 // pred_check_branch
      %62 = sbr.rel (0) target = $region73
    $region72: #{tpu_custom_call.1} parent=1 // pred_region
      _
    $region73: #{tpu_custom_call.1} parent=1 // pred_fallthru
      _
    %v64 = vld [vmem:[%s0] sm:$0xf]
    %v65 = vld [vmem:[%s0 + $0x4] sm:$0xf]
    %v66 = vld [vmem:[%s13] sm:$0xff]
    %v67 = vld [vmem:[%s13 + $0x8] sm:$0xff]
    %v70 = vunpack.c.l.b16 %v64
    %v71 = vunpack.c.l.b16 %v65
    %v72 = vpack.c.b16 %v71, %v70
    %v75 = vunpack.c.l.b16 %v66
    %v76 = vunpack.c.h.b16 %v66
    %v77 = vunpack.c.l.b16 %v67
    %v78 = vunpack.c.h.b16 %v67
    %v79 = vpack.c.b16 %v77, %v75
    %v80 = vpack.c.b16 %v78, %v76
    %vm83 = vcmask 130048
    %v85 = vsel %vm83, %v72, 0
    %87 = vmatprep.subr.bf16.mxu0 %v80
    %88 = vmatpush1.bf16.msra.mxu0 %v79
    %89 = vmatprep.subr.bf16.mxu0 0
    %90 = vmatpush1.bf16.msra.mxu0 0
    %91 = vmatprep.subr.bf16.mxu0 0
    %92 = vmatpush1.bf16.msra.mxu0 0
    %93 = vmatprep.subr.bf16.mxu0 0
    %94 = vmatpush1.bf16.msra.mxu0 0
    %95 = vmatprep.subr.bf16.mxu0 0
    %96 = vmatpush1.bf16.msra.mxu0 0
    %97 = vmatprep.subr.bf16.mxu0 0
    %98 = vmatpush1.bf16.msra.mxu0 0
    %99 = vmatprep.subr.bf16.mxu0 0
    %100 = vmatpush1.bf16.msra.mxu0 0
    %101 = vmatprep.subr.bf16.mxu0 0
    %102 = vmatpush1.bf16.msra.mxu0 0
    %103 = vmatprep.subr.bf16.mxu0 0
    %104 = vmatpush1.bf16.msra.mxu0 0
    %105 = vmatprep.subr.bf16.mxu0 0
    %106 = vmatpush1.bf16.msra.mxu0 0
    %107 = vmatprep.subr.bf16.mxu0 0
    %108 = vmatpush1.bf16.msra.mxu0 0
    %109 = vmatprep.subr.bf16.mxu0 0
    %110 = vmatpush1.bf16.msra.mxu0 0
    %111 = vmatprep.subr.bf16.mxu0 0
    %112 = vmatpush1.bf16.msra.mxu0 0
    %113 = vmatprep.subr.bf16.mxu0 0
    %114 = vmatpush1.bf16.msra.mxu0 0
    %115 = vmatprep.subr.bf16.mxu0 0
    %116 = vmatpush1.bf16.msra.mxu0 0
    %117 = vmatprep.subr.bf16.mxu0 0
    %118 = vmatpush1.bf16.msra.mxu0 0
    %119 = vmatprep.mubr.bf16.mxu0 0
    %120 = vmatmul.mubr.bf16.gmra.mrb[0].mxu0 %v85
    %v121 = vpop.f32.mrb[0].mxu0
    %v122 = vadd.f32 0.0, %v121
    %v123 = vpop.f32.mrb[0].mxu0
    %v124 = vadd.f32 0.0, %v123
    %v125 = vpop.f32.mrb[0].mxu0
    %v126 = vadd.f32 0.0, %v125
    %v127 = vpop.f32.mrb[0].mxu0
    %v128 = vadd.f32 0.0, %v127
    %129 = vdwg.mxu0
    %v130 = vld [vmem:[%s1] sm:$0xf]
    %v131 = vld [vmem:[%s1 + $0x4] sm:$0xf]
    %v132 = vunpack.c.l.bf16 %v130
    %v133 = vunpack.c.l.bf16 %v131
    %v134 = vsel %vm83, %v132, -inf
    %135 = vmax.xlane.f32.xlu0 %v134
    %v136 = vpop.xlane.xlu0 %135
    %v137 = vsel %vm83, %v133, -inf
    %138 = vmax.xlane.f32.xlu0 %v137
    %v139 = vpop.xlane.xlu0 %138
    %vm140 = vcmp.gt.f32.partialorder %v136, -1e+20
    %vm141 = vcmp.gt.f32.partialorder %v139, -1e+20
    %v142 = vsel %vm140, 1, 0
    %v143 = vsel %vm141, 1, 0
    %v144 = vcvt.s32.f32 %v142
    %v145 = vcvt.s32.f32 %v143
    %v146 = vld [vmem:[%s3] sm:$0xf]
    %v147 = vld [vmem:[%s3 + $0x4] sm:$0xf]
    %v148 = vld [vmem:[%s5] sm:$0xf]
    %v151 = vunpack.c.l.b16 %v146
    %v152 = vunpack.c.l.b16 %v147
    %v153 = vpack.c.b16 %v152, %v151
    %vm154 = vcmask 64512
    %v156 = vsel %vm154, %v153, 0
    %vm158 = vcmask 1043456
    %v160 = vsel %vm158, %v148, 0
    %162 = vmatprep.subr.bf16.mxu0 0
    %163 = vmatpush1.bf16.msra.mxu0 %v160
    %164 = vmatprep.subr.bf16.mxu0 0
    %165 = vmatpush1.bf16.msra.mxu0 0
    %166 = vmatprep.subr.bf16.mxu0 0
    %167 = vmatpush1.bf16.msra.mxu0 0
    %168 = vmatprep.subr.bf16.mxu0 0
    %169 = vmatpush1.bf16.msra.mxu0 0
    %170 = vmatprep.subr.bf16.mxu0 0
    %171 = vmatpush1.bf16.msra.mxu0 0
    %172 = vmatprep.subr.bf16.mxu0 0
    %173 = vmatpush1.bf16.msra.mxu0 0
    %174 = vmatprep.subr.bf16.mxu0 0
    %175 = vmatpush1.bf16.msra.mxu0 0
    %176 = vmatprep.subr.bf16.mxu0 0
    %177 = vmatpush1.bf16.msra.mxu0 0
    %178 = vmatprep.subr.bf16.mxu0 0
    %179 = vmatpush1.bf16.msra.mxu0 0
    %180 = vmatprep.subr.bf16.mxu0 0
    %181 = vmatpush1.bf16.msra.mxu0 0
    %182 = vmatprep.subr.bf16.mxu0 0
    %183 = vmatpush1.bf16.msra.mxu0 0
    %184 = vmatprep.subr.bf16.mxu0 0
    %185 = vmatpush1.bf16.msra.mxu0 0
    %186 = vmatprep.subr.bf16.mxu0 0
    %187 = vmatpush1.bf16.msra.mxu0 0
    %188 = vmatprep.subr.bf16.mxu0 0
    %189 = vmatpush1.bf16.msra.mxu0 0
    %190 = vmatprep.subr.bf16.mxu0 0
    %191 = vmatpush1.bf16.msra.mxu0 0
    %192 = vmatprep.subr.bf16.mxu0 0
    %193 = vmatpush1.bf16.msra.mxu0 0
    %194 = vmatprep.mubr.bf16.mxu0 0
    %195 = vmatmul.mubr.bf16.gmra.mrb[0].mxu0 %v156
    %v196 = vpop.f32.mrb[0].mxu0
    %v197 = vadd.f32 0.0, %v196
    %v198 = vpop.f32.mrb[0].mxu0
    %v199 = vpop.f32.mrb[0].mxu0
    %v200 = vadd.f32 0.0, %v199
    %v201 = vpop.f32.mrb[0].mxu0
    %202 = vdwg.mxu0
    %v203 = vpack.c.bf16 %v200, %v197
    %v204 = vld [vmem:[%s6] sm:$0x3]
    %v205 = vld [vmem:[%s4] sm:$0xf]
    %v207 = vsel %vm154, %v204, 0
    %v210 = vsel %vm158, %v205, 0
    %212 = vmatprep.subr.bf16.mxu0 0
    %213 = vmatpush1.bf16.msra.mxu0 %v210
    %214 = vmatprep.subr.bf16.mxu0 0
    %215 = vmatpush1.bf16.msra.mxu0 0
    %216 = vmatprep.subr.bf16.mxu0 0
    %217 = vmatpush1.bf16.msra.mxu0 0
    %218 = vmatprep.subr.bf16.mxu0 0
    %219 = vmatpush1.bf16.msra.mxu0 0
    %220 = vmatprep.subr.bf16.mxu0 0
    %221 = vmatpush1.bf16.msra.mxu0 0
    %222 = vmatprep.subr.bf16.mxu0 0
    %223 = vmatpush1.bf16.msra.mxu0 0
    %224 = vmatprep.subr.bf16.mxu0 0
    %225 = vmatpush1.bf16.msra.mxu0 0
    %226 = vmatprep.subr.bf16.mxu0 0
    %227 = vmatpush1.bf16.msra.mxu0 0
    %228 = vmatprep.subr.bf16.mxu0 0
    %229 = vmatpush1.bf16.msra.mxu0 0
    %230 = vmatprep.subr.bf16.mxu0 0
    %231 = vmatpush1.bf16.msra.mxu0 0
    %232 = vmatprep.subr.bf16.mxu0 0
    %233 = vmatpush1.bf16.msra.mxu0 0
    %234 = vmatprep.subr.bf16.mxu0 0
    %235 = vmatpush1.bf16.msra.mxu0 0
    %236 = vmatprep.subr.bf16.mxu0 0
    %237 = vmatpush1.bf16.msra.mxu0 0
    %238 = vmatprep.subr.bf16.mxu0 0
    %239 = vmatpush1.bf16.msra.mxu0 0
    %240 = vmatprep.subr.bf16.mxu0 0
    %241 = vmatpush1.bf16.msra.mxu0 0
    %242 = vmatprep.subr.bf16.mxu0 0
    %243 = vmatpush1.bf16.msra.mxu0 0
    %244 = vmatprep.mubr.bf16.mxu0 0
    %245 = vmatmul.mubr.bf16.gmra.mrb[0].mxu0 %v207
    %v246 = vpop.f32.mrb[0].mxu0
    %v247 = vadd.f32 0.0, %v246
    %v248 = vpop.f32.mrb[0].mxu0
    %v249 = vpop.f32.mrb[0].mxu0
    %v250 = vpop.f32.mrb[0].mxu0
    %251 = vdwg.mxu0
    %253 = vset.pattern.permute.xlu0 32
    %254 = vperm.xlu0 %253, %v122
    %v255 = vpop.permute.xlu0 %254
    %258 = vset.pattern.permute.xlu0 32
    %259 = vperm.xlu0 %258, %v126
    %v260 = vpop.permute.xlu0 %259
    %v262 = vlaneseq
    %v263 = vshrl.u32 %v262, 7
    %v264 = vsub.s32 0, %v263
    %v265 = vrot.slane %v247, %v264
    %v266 = vadd.f32 %v255, %v265
    %v267 = vadd.f32 %v260, %v265
    %vm268 = vcmp.ge.f32.partialorder %v266, 0.0
    %vm269 = vcmp.ge.f32.partialorder %v267, 0.0
    %v270 = vmul.f32 %v266, 0.2
    %v271 = vmul.f32 %v267, 0.2
    %v272 = vsel %vm268, %v266, %v270
    %v273 = vsel %vm269, %v267, %v271
    %v274 = vadd.f32 %v272, %v132
    %v275 = vadd.f32 %v273, %v133
    %v276 = vsel %vm83, %v274, -inf
    %277 = vmax.xlane.f32.xlu0 %v276
    %v278 = vpop.xlane.xlu0 %277
    %v279 = vsel %vm83, %v275, -inf
    %280 = vmax.xlane.f32.xlu0 %v279
    %v281 = vpop.xlane.xlu0 %280
    %v282 = vsub.f32 %v274, %v278
    %v283 = vsub.f32 %v275, %v281
    %v284 = vmul.f32 %v282, 1.442695
    %v285 = vpow.pop %v284
    %v286 = vmul.f32 %v283, 1.442695
    %v287 = vpow.pop %v286
    %v288 = vsel %vm83, %v285, 0.0
    %289 = vadd.xlane.f32.xlu0 %v288
    %v290 = vpop.xlane.xlu0 %289
    %v291 = vsel %vm83, %v287, 0.0
    %292 = vadd.xlane.f32.xlu0 %v291
    %v293 = vpop.xlane.xlu0 %292
    %v294 = vrcp.pop %v290
    %v295 = vrcp.pop %v293
    %v296 = vmul.f32 %v144, %v294
    %v297 = vmul.f32 %v145, %v295
    %v298 = vpack.c.bf16 %v287, %v285
    %v300 = vsel %vm83, %v298, 0
    %302 = vmatprep.subr.bf16.mxu0 0
    %303 = vmatpush1.bf16.msra.mxu0 %v203
    %304 = vmatprep.subr.bf16.mxu0 0
    %305 = vmatpush1.bf16.msra.mxu0 0
    %306 = vmatprep.subr.bf16.mxu0 0
    %307 = vmatpush1.bf16.msra.mxu0 0
    %308 = vmatprep.subr.bf16.mxu0 0
    %309 = vmatpush1.bf16.msra.mxu0 0
    %310 = vmatprep.subr.bf16.mxu0 0
    %311 = vmatpush1.bf16.msra.mxu0 0
    %312 = vmatprep.subr.bf16.mxu0 0
    %313 = vmatpush1.bf16.msra.mxu0 0
    %314 = vmatprep.subr.bf16.mxu0 0
    %315 = vmatpush1.bf16.msra.mxu0 0
    %316 = vmatprep.subr.bf16.mxu0 0
    %317 = vmatpush1.bf16.msra.mxu0 0
    %318 = vmatprep.subr.bf16.mxu0 0
    %319 = vmatpush1.bf16.msra.mxu0 0
    %320 = vmatprep.subr.bf16.mxu0 0
    %321 = vmatpush1.bf16.msra.mxu0 0
    %322 = vmatprep.subr.bf16.mxu0 0
    %323 = vmatpush1.bf16.msra.mxu0 0
    %324 = vmatprep.subr.bf16.mxu0 0
    %325 = vmatpush1.bf16.msra.mxu0 0
    %326 = vmatprep.subr.bf16.mxu0 0
    %327 = vmatpush1.bf16.msra.mxu0 0
    %328 = vmatprep.subr.bf16.mxu0 0
    %329 = vmatpush1.bf16.msra.mxu0 0
    %330 = vmatprep.subr.bf16.mxu0 0
    %331 = vmatpush1.bf16.msra.mxu0 0
    %332 = vmatprep.subr.bf16.mxu0 0
    %333 = vmatpush1.bf16.msra.mxu0 0
    %334 = vmatprep.mubr.bf16.mxu0 0
    %335 = vmatmul.mubr.bf16.gmra.mrb[0].mxu0 %v300
    %v336 = vpop.f32.mrb[0].mxu0
    %v337 = vadd.f32 0.0, %v336
    %v338 = vpop.f32.mrb[0].mxu0
    %v339 = vpop.f32.mrb[0].mxu0
    %v340 = vadd.f32 0.0, %v339
    %v341 = vpop.f32.mrb[0].mxu0
    %342 = vdwg.mxu0
    %v343 = vld [vmem:[%s14] sm:$0x1]
    %v344 = vlaneseq
    %v345 = vshrl.u32 %v344, 7
    %v346 = vsub.s32 0, %v345
    %v347 = vrot.slane %v343, %v346
    %v348 = vmul.f32 %v296, %v347
    %v349 = vmul.f32 %v297, %v347
    %v350 = vmul.f32 %v337, %v348
    %v351 = vmul.f32 %v340, %v349
    %v352 = vadd.f32 %v350, 0.0
    %v353 = vadd.f32 %v351, 0.0
    %354 = vset.pattern.permute.xlu0 33
    %355 = vperm.xlu0 %354, %v122
    %v356 = vpop.permute.xlu0 %355
    %358 = vset.pattern.permute.xlu0 33
    %359 = vperm.xlu0 %358, %v126
    %v360 = vpop.permute.xlu0 %359
    %v362 = vlaneseq
    %v363 = vshrl.u32 %v362, 7
    %v364 = vsub.s32 1, %v363
    %v365 = vrot.slane %v247, %v364
    %v366 = vadd.f32 %v356, %v365
    %v367 = vadd.f32 %v360, %v365
    %vm368 = vcmp.ge.f32.partialorder %v366, 0.0
    %vm369 = vcmp.ge.f32.partialorder %v367, 0.0
    %v370 = vmul.f32 %v366, 0.2
    %v371 = vmul.f32 %v367, 0.2
    %v372 = vsel %vm368, %v366, %v370
    %v373 = vsel %vm369, %v367, %v371
    %v374 = vadd.f32 %v372, %v132
    %v375 = vadd.f32 %v373, %v133
    %v376 = vsel %vm83, %v374, -inf
    %377 = vmax.xlane.f32.xlu0 %v376
    %v378 = vpop.xlane.xlu0 %377
    %v379 = vsel %vm83, %v375, -inf
    %380 = vmax.xlane.f32.xlu0 %v379
    %v381 = vpop.xlane.xlu0 %380
    %v382 = vsub.f32 %v374, %v378
    %v383 = vsub.f32 %v375, %v381
    %v384 = vmul.f32 %v382, 1.442695
    %v385 = vpow.pop %v384
    %v386 = vmul.f32 %v383, 1.442695
    %v387 = vpow.pop %v386
    %v388 = vsel %vm83, %v385, 0.0
    %389 = vadd.xlane.f32.xlu0 %v388
    %v390 = vpop.xlane.xlu0 %389
    %v391 = vsel %vm83, %v387, 0.0
    %392 = vadd.xlane.f32.xlu0 %v391
    %v393 = vpop.xlane.xlu0 %392
    %v394 = vrcp.pop %v390
    %v395 = vrcp.pop %v393
    %v396 = vmul.f32 %v144, %v394
    %v397 = vmul.f32 %v145, %v395
    %v398 = vpack.c.bf16 %v387, %v385
    %v400 = vsel %vm83, %v398, 0
    %402 = vmatprep.subr.bf16.mxu0 0
    %403 = vmatpush1.bf16.msra.mxu0 %v203
    %404 = vmatprep.subr.bf16.mxu0 0
    %405 = vmatpush1.bf16.msra.mxu0 0
    %406 = vmatprep.subr.bf16.mxu0 0
    %407 = vmatpush1.bf16.msra.mxu0 0
    %408 = vmatprep.subr.bf16.mxu0 0
    %409 = vmatpush1.bf16.msra.mxu0 0
    %410 = vmatprep.subr.bf16.mxu0 0
    %411 = vmatpush1.bf16.msra.mxu0 0
    %412 = vmatprep.subr.bf16.mxu0 0
    %413 = vmatpush1.bf16.msra.mxu0 0
    %414 = vmatprep.subr.bf16.mxu0 0
    %415 = vmatpush1.bf16.msra.mxu0 0
    %416 = vmatprep.subr.bf16.mxu0 0
    %417 = vmatpush1.bf16.msra.mxu0 0
    %418 = vmatprep.subr.bf16.mxu0 0
    %419 = vmatpush1.bf16.msra.mxu0 0
    %420 = vmatprep.subr.bf16.mxu0 0
    %421 = vmatpush1.bf16.msra.mxu0 0
    %422 = vmatprep.subr.bf16.mxu0 0
    %423 = vmatpush1.bf16.msra.mxu0 0
    %424 = vmatprep.subr.bf16.mxu0 0
    %425 = vmatpush1.bf16.msra.mxu0 0
    %426 = vmatprep.subr.bf16.mxu0 0
    %427 = vmatpush1.bf16.msra.mxu0 0
    %428 = vmatprep.subr.bf16.mxu0 0
    %429 = vmatpush1.bf16.msra.mxu0 0
    %430 = vmatprep.subr.bf16.mxu0 0
    %431 = vmatpush1.bf16.msra.mxu0 0
    %432 = vmatprep.subr.bf16.mxu0 0
    %433 = vmatpush1.bf16.msra.mxu0 0
    %434 = vmatprep.mubr.bf16.mxu0 0
    %435 = vmatmul.mubr.bf16.gmra.mrb[0].mxu0 %v400
    %v436 = vpop.f32.mrb[0].mxu0
    %v437 = vadd.f32 0.0, %v436
    %v438 = vpop.f32.mrb[0].mxu0
    %v439 = vpop.f32.mrb[0].mxu0
    %v440 = vadd.f32 0.0, %v439
    %v441 = vpop.f32.mrb[0].mxu0
    %442 = vdwg.mxu0
    %v443 = vld [vmem:[%s14 + $0x1] sm:$0x1]
    %v444 = vlaneseq
    %v445 = vshrl.u32 %v444, 7
    %v446 = vsub.s32 0, %v445
    %v447 = vrot.slane %v443, %v446
    %v448 = vmul.f32 %v396, %v447
    %v449 = vmul.f32 %v397, %v447
    %v450 = vmul.f32 %v437, %v448
    %v451 = vmul.f32 %v440, %v449
    %v452 = vadd.f32 %v352, %v450
    %v453 = vadd.f32 %v353, %v451
    %454 = vset.pattern.permute.xlu0 34
    %455 = vperm.xlu0 %454, %v122
    %v456 = vpop.permute.xlu0 %455
    %458 = vset.pattern.permute.xlu0 34
    %459 = vperm.xlu0 %458, %v126
    %v460 = vpop.permute.xlu0 %459
    %v462 = vlaneseq
    %v463 = vshrl.u32 %v462, 7
    %v464 = vsub.s32 2, %v463
    %v465 = vrot.slane %v247, %v464
    %v466 = vadd.f32 %v456, %v465
    %v467 = vadd.f32 %v460, %v465
    %vm468 = vcmp.ge.f32.partialorder %v466, 0.0
    %vm469 = vcmp.ge.f32.partialorder %v467, 0.0
    %v470 = vmul.f32 %v466, 0.2
    %v471 = vmul.f32 %v467, 0.2
    %v472 = vsel %vm468, %v466, %v470
    %v473 = vsel %vm469, %v467, %v471
    %v474 = vadd.f32 %v472, %v132
    %v475 = vadd.f32 %v473, %v133
    %v476 = vsel %vm83, %v474, -inf
    %477 = vmax.xlane.f32.xlu0 %v476
    %v478 = vpop.xlane.xlu0 %477
    %v479 = vsel %vm83, %v475, -inf
    %480 = vmax.xlane.f32.xlu0 %v479
    %v481 = vpop.xlane.xlu0 %480
    %v482 = vsub.f32 %v474, %v478
    %v483 = vsub.f32 %v475, %v481
    %v484 = vmul.f32 %v482, 1.442695
    %v485 = vpow.pop %v484
    %v486 = vmul.f32 %v483, 1.442695
    %v487 = vpow.pop %v486
    %v488 = vsel %vm83, %v485, 0.0
    %489 = vadd.xlane.f32.xlu0 %v488
    %v490 = vpop.xlane.xlu0 %489
    %v491 = vsel %vm83, %v487, 0.0
    %492 = vadd.xlane.f32.xlu0 %v491
    %v493 = vpop.xlane.xlu0 %492
    %v494 = vrcp.pop %v490
    %v495 = vrcp.pop %v493
    %v496 = vmul.f32 %v144, %v494
    %v497 = vmul.f32 %v145, %v495
    %v498 = vpack.c.bf16 %v487, %v485
    %v500 = vsel %vm83, %v498, 0
    %502 = vmatprep.subr.bf16.mxu0 0
    %503 = vmatpush1.bf16.msra.mxu0 %v203
    %504 = vmatprep.subr.bf16.mxu0 0
    %505 = vmatpush1.bf16.msra.mxu0 0
    %506 = vmatprep.subr.bf16.mxu0 0
    %507 = vmatpush1.bf16.msra.mxu0 0
    %508 = vmatprep.subr.bf16.mxu0 0
    %509 = vmatpush1.bf16.msra.mxu0 0
    %510 = vmatprep.subr.bf16.mxu0 0
    %511 = vmatpush1.bf16.msra.mxu0 0
    %512 = vmatprep.subr.bf16.mxu0 0
    %513 = vmatpush1.bf16.msra.mxu0 0
    %514 = vmatprep.subr.bf16.mxu0 0
    %515 = vmatpush1.bf16.msra.mxu0 0
    %516 = vmatprep.subr.bf16.mxu0 0
    %517 = vmatpush1.bf16.msra.mxu0 0
    %518 = vmatprep.subr.bf16.mxu0 0
    %519 = vmatpush1.bf16.msra.mxu0 0
    %520 = vmatprep.subr.bf16.mxu0 0
    %521 = vmatpush1.bf16.msra.mxu0 0
    %522 = vmatprep.subr.bf16.mxu0 0
    %523 = vmatpush1.bf16.msra.mxu0 0
    %524 = vmatprep.subr.bf16.mxu0 0
    %525 = vmatpush1.bf16.msra.mxu0 0
    %526 = vmatprep.subr.bf16.mxu0 0
    %527 = vmatpush1.bf16.msra.mxu0 0
    %528 = vmatprep.subr.bf16.mxu0 0
    %529 = vmatpush1.bf16.msra.mxu0 0
    %530 = vmatprep.subr.bf16.mxu0 0
    %531 = vmatpush1.bf16.msra.mxu0 0
    %532 = vmatprep.subr.bf16.mxu0 0
    %533 = vmatpush1.bf16.msra.mxu0 0
    %534 = vmatprep.mubr.bf16.mxu0 0
    %535 = vmatmul.mubr.bf16.gmra.mrb[0].mxu0 %v500
    %v536 = vpop.f32.mrb[0].mxu0
    %v537 = vadd.f32 0.0, %v536
    %v538 = vpop.f32.mrb[0].mxu0
    %v539 = vpop.f32.mrb[0].mxu0
    %v540 = vadd.f32 0.0, %v539
    %v541 = vpop.f32.mrb[0].mxu0
    %542 = vdwg.mxu0
    %v543 = vld [vmem:[%s14 + $0x2] sm:$0x1]
    %v544 = vlaneseq
    %v545 = vshrl.u32 %v544, 7
    %v546 = vsub.s32 0, %v545
    %v547 = vrot.slane %v543, %v546
    %v548 = vmul.f32 %v496, %v547
    %v549 = vmul.f32 %v497, %v547
    %v550 = vmul.f32 %v537, %v548
    %v551 = vmul.f32 %v540, %v549
    %v552 = vadd.f32 %v452, %v550
    %v553 = vadd.f32 %v453, %v551
    %554 = vset.pattern.permute.xlu0 35
    %555 = vperm.xlu0 %554, %v122
    %v556 = vpop.permute.xlu0 %555
    %558 = vset.pattern.permute.xlu0 35
    %559 = vperm.xlu0 %558, %v126
    %v560 = vpop.permute.xlu0 %559
    %v562 = vlaneseq
    %v563 = vshrl.u32 %v562, 7
    %v564 = vsub.s32 3, %v563
    %v565 = vrot.slane %v247, %v564
    %v566 = vadd.f32 %v556, %v565
    %v567 = vadd.f32 %v560, %v565
    %vm568 = vcmp.ge.f32.partialorder %v566, 0.0
    %vm569 = vcmp.ge.f32.partialorder %v567, 0.0
    %v570 = vmul.f32 %v566, 0.2
    %v571 = vmul.f32 %v567, 0.2
    %v572 = vsel %vm568, %v566, %v570
    %v573 = vsel %vm569, %v567, %v571
    %v574 = vadd.f32 %v572, %v132
    %v575 = vadd.f32 %v573, %v133
    %v576 = vsel %vm83, %v574, -inf
    %577 = vmax.xlane.f32.xlu0 %v576
    %v578 = vpop.xlane.xlu0 %577
    %v579 = vsel %vm83, %v575, -inf
    %580 = vmax.xlane.f32.xlu0 %v579
    %v581 = vpop.xlane.xlu0 %580
    %v582 = vsub.f32 %v574, %v578
    %v583 = vsub.f32 %v575, %v581
    %v584 = vmul.f32 %v582, 1.442695
    %v585 = vpow.pop %v584
    %v586 = vmul.f32 %v583, 1.442695
    %v587 = vpow.pop %v586
    %v588 = vsel %vm83, %v585, 0.0
    %589 = vadd.xlane.f32.xlu0 %v588
    %v590 = vpop.xlane.xlu0 %589
    %v591 = vsel %vm83, %v587, 0.0
    %592 = vadd.xlane.f32.xlu0 %v591
    %v593 = vpop.xlane.xlu0 %592
    %v594 = vrcp.pop %v590
    %v595 = vrcp.pop %v593
    %v596 = vmul.f32 %v144, %v594
    %v597 = vmul.f32 %v145, %v595
    %v598 = vpack.c.bf16 %v587, %v585
    %v600 = vsel %vm83, %v598, 0
    %602 = vmatprep.subr.bf16.mxu0 0
    %603 = vmatpush1.bf16.msra.mxu0 %v203
    %604 = vmatprep.subr.bf16.mxu0 0
    %605 = vmatpush1.bf16.msra.mxu0 0
    %606 = vmatprep.subr.bf16.mxu0 0
    %607 = vmatpush1.bf16.msra.mxu0 0
    %608 = vmatprep.subr.bf16.mxu0 0
    %609 = vmatpush1.bf16.msra.mxu0 0
    %610 = vmatprep.subr.bf16.mxu0 0
    %611 = vmatpush1.bf16.msra.mxu0 0
    %612 = vmatprep.subr.bf16.mxu0 0
    %613 = vmatpush1.bf16.msra.mxu0 0
    %614 = vmatprep.subr.bf16.mxu0 0
    %615 = vmatpush1.bf16.msra.mxu0 0
    %616 = vmatprep.subr.bf16.mxu0 0
    %617 = vmatpush1.bf16.msra.mxu0 0
    %618 = vmatprep.subr.bf16.mxu0 0
    %619 = vmatpush1.bf16.msra.mxu0 0
    %620 = vmatprep.subr.bf16.mxu0 0
    %621 = vmatpush1.bf16.msra.mxu0 0
    %622 = vmatprep.subr.bf16.mxu0 0
    %623 = vmatpush1.bf16.msra.mxu0 0
    %624 = vmatprep.subr.bf16.mxu0 0
    %625 = vmatpush1.bf16.msra.mxu0 0
    %626 = vmatprep.subr.bf16.mxu0 0
    %627 = vmatpush1.bf16.msra.mxu0 0
    %628 = vmatprep.subr.bf16.mxu0 0
    %629 = vmatpush1.bf16.msra.mxu0 0
    %630 = vmatprep.subr.bf16.mxu0 0
    %631 = vmatpush1.bf16.msra.mxu0 0
    %632 = vmatprep.subr.bf16.mxu0 0
    %633 = vmatpush1.bf16.msra.mxu0 0
    %634 = vmatprep.mubr.bf16.mxu0 0
    %635 = vmatmul.mubr.bf16.gmra.mrb[0].mxu0 %v600
    %v636 = vpop.f32.mrb[0].mxu0
    %v637 = vadd.f32 0.0, %v636
    %v638 = vpop.f32.mrb[0].mxu0
    %v639 = vpop.f32.mrb[0].mxu0
    %v640 = vadd.f32 0.0, %v639
    %v641 = vpop.f32.mrb[0].mxu0
    %642 = vdwg.mxu0
    %v643 = vld [vmem:[%s14 + $0x3] sm:$0x1]
    %v644 = vlaneseq
    %v645 = vshrl.u32 %v644, 7
    %v646 = vsub.s32 0, %v645
    %v647 = vrot.slane %v643, %v646
    %v648 = vmul.f32 %v596, %v647
    %v649 = vmul.f32 %v597, %v647
    %v650 = vmul.f32 %v637, %v648
    %v651 = vmul.f32 %v640, %v649
    %v652 = vadd.f32 %v552, %v650
    %v653 = vadd.f32 %v553, %v651
    %v654 = vadd.f32 %v652, %v122
    %v655 = vadd.f32 %v653, %v126
    %v656 = vld [vmem:[%s7] sm:$0x1]
    %v658 = vlaneseq
    %v659 = vshrl.u32 %v658, 7
    %v660 = vsub.s32 0, %v659
    %v661 = vrot.slane %v656, %v660
    %v663 = vadd.f32 %v654, %v661
    %v664 = vadd.f32 %v655, %v661
    %vm665 = vcmp.ge.f32.partialorder %v663, 0.0
    %vm666 = vcmp.ge.f32.partialorder %v664, 0.0
    %v667 = vmul.f32 %v663, 0.01
    %v668 = vmul.f32 %v664, 0.01
    %v669 = vsel %vm665, %v663, %v667
    %v670 = vsel %vm666, %v664, %v668
    %v671 = vld [vmem:[%s2] sm:$0xf]
    %v672 = vld [vmem:[%s2 + $0x4] sm:$0xf]
    %v673 = vunpack.c.l.bf16 %v671
    %v674 = vunpack.c.l.bf16 %v672
    %v675 = vsel %vm154, %v673, -inf
    %676 = vmax.xlane.f32.xlu0 %v675
    %v677 = vpop.xlane.xlu0 %676
    %v678 = vsel %vm154, %v674, -inf
    %679 = vmax.xlane.f32.xlu0 %v678
    %v680 = vpop.xlane.xlu0 %679
    %vm681 = vcmp.gt.f32.partialorder %v677, -1e+20
    %vm682 = vcmp.gt.f32.partialorder %v680, -1e+20
    %v683 = vsel %vm681, 1, 0
    %v684 = vsel %vm682, 1, 0
    %v685 = vcvt.s32.f32 %v683
    %v686 = vcvt.s32.f32 %v684
    %v687 = vld [vmem:[%s8] sm:$0xf]
    %v688 = vld [vmem:[%s10] sm:$0xf]
    %v690 = vsel %vm154, %v687, 0
    %v693 = vsel %vm158, %v688, 0
    %695 = vmatprep.subr.bf16.mxu0 0
    %696 = vmatpush1.bf16.msra.mxu0 %v693
    %697 = vmatprep.subr.bf16.mxu0 0
    %698 = vmatpush1.bf16.msra.mxu0 0
    %699 = vmatprep.subr.bf16.mxu0 0
    %700 = vmatpush1.bf16.msra.mxu0 0
    %701 = vmatprep.subr.bf16.mxu0 0
    %702 = vmatpush1.bf16.msra.mxu0 0
    %703 = vmatprep.subr.bf16.mxu0 0
    %704 = vmatpush1.bf16.msra.mxu0 0
    %705 = vmatprep.subr.bf16.mxu0 0
    %706 = vmatpush1.bf16.msra.mxu0 0
    %707 = vmatprep.subr.bf16.mxu0 0
    %708 = vmatpush1.bf16.msra.mxu0 0
    %709 = vmatprep.subr.bf16.mxu0 0
    %710 = vmatpush1.bf16.msra.mxu0 0
    %711 = vmatprep.subr.bf16.mxu0 0
    %712 = vmatpush1.bf16.msra.mxu0 0
    %713 = vmatprep.subr.bf16.mxu0 0
    %714 = vmatpush1.bf16.msra.mxu0 0
    %715 = vmatprep.subr.bf16.mxu0 0
    %716 = vmatpush1.bf16.msra.mxu0 0
    %717 = vmatprep.subr.bf16.mxu0 0
    %718 = vmatpush1.bf16.msra.mxu0 0
    %719 = vmatprep.subr.bf16.mxu0 0
    %720 = vmatpush1.bf16.msra.mxu0 0
    %721 = vmatprep.subr.bf16.mxu0 0
    %722 = vmatpush1.bf16.msra.mxu0 0
    %723 = vmatprep.subr.bf16.mxu0 0
    %724 = vmatpush1.bf16.msra.mxu0 0
    %725 = vmatprep.subr.bf16.mxu0 0
    %726 = vmatpush1.bf16.msra.mxu0 0
    %727 = vmatprep.mubr.bf16.mxu0 0
    %728 = vmatmul.mubr.bf16.gmra.mrb[0].mxu0 %v690
    %v729 = vpop.f32.mrb[0].mxu0
    %v730 = vadd.f32 0.0, %v729
    %v731 = vpop.f32.mrb[0].mxu0
    %v732 = vpop.f32.mrb[0].mxu0
    %v733 = vpop.f32.mrb[0].mxu0
    %734 = vdwg.mxu0
    %v735 = vpack.c.bf16 %v730, %v730
    %v736 = vld [vmem:[%s11] sm:$0x3]
    %v737 = vld [vmem:[%s9] sm:$0xf]
    %v739 = vsel %vm154, %v736, 0
    %v742 = vsel %vm158, %v737, 0
    %744 = vmatprep.subr.bf16.mxu0 0
    %745 = vmatpush1.bf16.msra.mxu0 %v742
    %746 = vmatprep.subr.bf16.mxu0 0
    %747 = vmatpush1.bf16.msra.mxu0 0
    %748 = vmatprep.subr.bf16.mxu0 0
    %749 = vmatpush1.bf16.msra.mxu0 0
    %750 = vmatprep.subr.bf16.mxu0 0
    %751 = vmatpush1.bf16.msra.mxu0 0
    %752 = vmatprep.subr.bf16.mxu0 0
    %753 = vmatpush1.bf16.msra.mxu0 0
    %754 = vmatprep.subr.bf16.mxu0 0
    %755 = vmatpush1.bf16.msra.mxu0 0
    %756 = vmatprep.subr.bf16.mxu0 0
    %757 = vmatpush1.bf16.msra.mxu0 0
    %758 = vmatprep.subr.bf16.mxu0 0
    %759 = vmatpush1.bf16.msra.mxu0 0
    %760 = vmatprep.subr.bf16.mxu0 0
    %761 = vmatpush1.bf16.msra.mxu0 0
    %762 = vmatprep.subr.bf16.mxu0 0
    %763 = vmatpush1.bf16.msra.mxu0 0
    %764 = vmatprep.subr.bf16.mxu0 0
    %765 = vmatpush1.bf16.msra.mxu0 0
    %766 = vmatprep.subr.bf16.mxu0 0
    %767 = vmatpush1.bf16.msra.mxu0 0
    %768 = vmatprep.subr.bf16.mxu0 0
    %769 = vmatpush1.bf16.msra.mxu0 0
    %770 = vmatprep.subr.bf16.mxu0 0
    %771 = vmatpush1.bf16.msra.mxu0 0
    %772 = vmatprep.subr.bf16.mxu0 0
    %773 = vmatpush1.bf16.msra.mxu0 0
    %774 = vmatprep.subr.bf16.mxu0 0
    %775 = vmatpush1.bf16.msra.mxu0 0
    %776 = vmatprep.mubr.bf16.mxu0 0
    %777 = vmatmul.mubr.bf16.gmra.mrb[0].mxu0 %v739
    %v778 = vpop.f32.mrb[0].mxu0
    %v779 = vadd.f32 0.0, %v778
    %v780 = vpop.f32.mrb[0].mxu0
    %v781 = vpop.f32.mrb[0].mxu0
    %v782 = vpop.f32.mrb[0].mxu0
    %783 = vdwg.mxu0
    %785 = vset.pattern.permute.xlu0 32
    %786 = vperm.xlu0 %785, %v124
    %v787 = vpop.permute.xlu0 %786
    %790 = vset.pattern.permute.xlu0 32
    %791 = vperm.xlu0 %790, %v128
    %v792 = vpop.permute.xlu0 %791
    %v794 = vlaneseq
    %v795 = vshrl.u32 %v794, 7
    %v796 = vsub.s32 0, %v795
    %v797 = vrot.slane %v779, %v796
    %v798 = vadd.f32 %v787, %v797
    %v799 = vadd.f32 %v792, %v797
    %vm800 = vcmp.ge.f32.partialorder %v798, 0.0
    %vm801 = vcmp.ge.f32.partialorder %v799, 0.0
    %v802 = vmul.f32 %v798, 0.2
    %v803 = vmul.f32 %v799, 0.2
    %v804 = vsel %vm800, %v798, %v802
    %v805 = vsel %vm801, %v799, %v803
    %v806 = vadd.f32 %v804, %v673
    %v807 = vadd.f32 %v805, %v674
    %v808 = vsel %vm154, %v806, -inf
    %809 = vmax.xlane.f32.xlu0 %v808
    %v810 = vpop.xlane.xlu0 %809
    %v811 = vsel %vm154, %v807, -inf
    %812 = vmax.xlane.f32.xlu0 %v811
    %v813 = vpop.xlane.xlu0 %812
    %v814 = vsub.f32 %v806, %v810
    %v815 = vsub.f32 %v807, %v813
    %v816 = vmul.f32 %v814, 1.442695
    %v817 = vpow.pop %v816
    %v818 = vmul.f32 %v815, 1.442695
    %v819 = vpow.pop %v818
    %v820 = vsel %vm154, %v817, 0.0
    %821 = vadd.xlane.f32.xlu0 %v820
    %v822 = vpop.xlane.xlu0 %821
    %v823 = vsel %vm154, %v819, 0.0
    %824 = vadd.xlane.f32.xlu0 %v823
    %v825 = vpop.xlane.xlu0 %824
    %v826 = vrcp.pop %v822
    %v827 = vrcp.pop %v825
    %v828 = vmul.f32 %v685, %v826
    %v829 = vmul.f32 %v686, %v827
    %v830 = vpack.c.bf16 %v819, %v817
    %v832 = vsel %vm154, %v830, 0
    %v835 = vsel %vm158, %v735, 0
    %837 = vmatprep.subr.bf16.mxu0 0
    %838 = vmatpush1.bf16.msra.mxu0 %v835
    %839 = vmatprep.subr.bf16.mxu0 0
    %840 = vmatpush1.bf16.msra.mxu0 0
    %841 = vmatprep.subr.bf16.mxu0 0
    %842 = vmatpush1.bf16.msra.mxu0 0
    %843 = vmatprep.subr.bf16.mxu0 0
    %844 = vmatpush1.bf16.msra.mxu0 0
    %845 = vmatprep.subr.bf16.mxu0 0
    %846 = vmatpush1.bf16.msra.mxu0 0
    %847 = vmatprep.subr.bf16.mxu0 0
    %848 = vmatpush1.bf16.msra.mxu0 0
    %849 = vmatprep.subr.bf16.mxu0 0
    %850 = vmatpush1.bf16.msra.mxu0 0
    %851 = vmatprep.subr.bf16.mxu0 0
    %852 = vmatpush1.bf16.msra.mxu0 0
    %853 = vmatprep.subr.bf16.mxu0 0
    %854 = vmatpush1.bf16.msra.mxu0 0
    %855 = vmatprep.subr.bf16.mxu0 0
    %856 = vmatpush1.bf16.msra.mxu0 0
    %857 = vmatprep.subr.bf16.mxu0 0
    %858 = vmatpush1.bf16.msra.mxu0 0
    %859 = vmatprep.subr.bf16.mxu0 0
    %860 = vmatpush1.bf16.msra.mxu0 0
    %861 = vmatprep.subr.bf16.mxu0 0
    %862 = vmatpush1.bf16.msra.mxu0 0
    %863 = vmatprep.subr.bf16.mxu0 0
    %864 = vmatpush1.bf16.msra.mxu0 0
    %865 = vmatprep.subr.bf16.mxu0 0
    %866 = vmatpush1.bf16.msra.mxu0 0
    %867 = vmatprep.subr.bf16.mxu0 0
    %868 = vmatpush1.bf16.msra.mxu0 0
    %869 = vmatprep.mubr.bf16.mxu0 0
    %870 = vmatmul.mubr.bf16.gmra.mrb[0].mxu0 %v832
    %v871 = vpop.f32.mrb[0].mxu0
    %v872 = vadd.f32 0.0, %v871
    %v873 = vpop.f32.mrb[0].mxu0
    %v874 = vpop.f32.mrb[0].mxu0
    %v875 = vadd.f32 0.0, %v874
    %v876 = vpop.f32.mrb[0].mxu0
    %877 = vdwg.mxu0
    %v878 = vmul.f32 %v828, %v347
    %v879 = vmul.f32 %v829, %v347
    %v880 = vmul.f32 %v872, %v878
    %v881 = vmul.f32 %v875, %v879
    %v882 = vadd.f32 %v880, 0.0
    %v883 = vadd.f32 %v881, 0.0
    %884 = vset.pattern.permute.xlu0 33
    %885 = vperm.xlu0 %884, %v124
    %v886 = vpop.permute.xlu0 %885
    %888 = vset.pattern.permute.xlu0 33
    %889 = vperm.xlu0 %888, %v128
    %v890 = vpop.permute.xlu0 %889
    %v892 = vlaneseq
    %v893 = vshrl.u32 %v892, 7
    %v894 = vsub.s32 1, %v893
    %v895 = vrot.slane %v779, %v894
    %v896 = vadd.f32 %v886, %v895
    %v897 = vadd.f32 %v890, %v895
    %vm898 = vcmp.ge.f32.partialorder %v896, 0.0
    %vm899 = vcmp.ge.f32.partialorder %v897, 0.0
    %v900 = vmul.f32 %v896, 0.2
    %v901 = vmul.f32 %v897, 0.2
    %v902 = vsel %vm898, %v896, %v900
    %v903 = vsel %vm899, %v897, %v901
    %v904 = vadd.f32 %v902, %v673
    %v905 = vadd.f32 %v903, %v674
    %v906 = vsel %vm154, %v904, -inf
    %907 = vmax.xlane.f32.xlu0 %v906
    %v908 = vpop.xlane.xlu0 %907
    %v909 = vsel %vm154, %v905, -inf
    %910 = vmax.xlane.f32.xlu0 %v909
    %v911 = vpop.xlane.xlu0 %910
    %v912 = vsub.f32 %v904, %v908
    %v913 = vsub.f32 %v905, %v911
    %v914 = vmul.f32 %v912, 1.442695
    %v915 = vpow.pop %v914
    %v916 = vmul.f32 %v913, 1.442695
    %v917 = vpow.pop %v916
    %v918 = vsel %vm154, %v915, 0.0
    %919 = vadd.xlane.f32.xlu0 %v918
    %v920 = vpop.xlane.xlu0 %919
    %v921 = vsel %vm154, %v917, 0.0
    %922 = vadd.xlane.f32.xlu0 %v921
    %v923 = vpop.xlane.xlu0 %922
    %v924 = vrcp.pop %v920
    %v925 = vrcp.pop %v923
    %v926 = vmul.f32 %v685, %v924
    %v927 = vmul.f32 %v686, %v925
    %v928 = vpack.c.bf16 %v917, %v915
    %v930 = vsel %vm154, %v928, 0
    %932 = vmatprep.subr.bf16.mxu0 0
    %933 = vmatpush1.bf16.msra.mxu0 %v835
    %934 = vmatprep.subr.bf16.mxu0 0
    %935 = vmatpush1.bf16.msra.mxu0 0
    %936 = vmatprep.subr.bf16.mxu0 0
    %937 = vmatpush1.bf16.msra.mxu0 0
    %938 = vmatprep.subr.bf16.mxu0 0
    %939 = vmatpush1.bf16.msra.mxu0 0
    %940 = vmatprep.subr.bf16.mxu0 0
    %941 = vmatpush1.bf16.msra.mxu0 0
    %942 = vmatprep.subr.bf16.mxu0 0
    %943 = vmatpush1.bf16.msra.mxu0 0
    %944 = vmatprep.subr.bf16.mxu0 0
    %945 = vmatpush1.bf16.msra.mxu0 0
    %946 = vmatprep.subr.bf16.mxu0 0
    %947 = vmatpush1.bf16.msra.mxu0 0
    %948 = vmatprep.subr.bf16.mxu0 0
    %949 = vmatpush1.bf16.msra.mxu0 0
    %950 = vmatprep.subr.bf16.mxu0 0
    %951 = vmatpush1.bf16.msra.mxu0 0
    %952 = vmatprep.subr.bf16.mxu0 0
    %953 = vmatpush1.bf16.msra.mxu0 0
    %954 = vmatprep.subr.bf16.mxu0 0
    %955 = vmatpush1.bf16.msra.mxu0 0
    %956 = vmatprep.subr.bf16.mxu0 0
    %957 = vmatpush1.bf16.msra.mxu0 0
    %958 = vmatprep.subr.bf16.mxu0 0
    %959 = vmatpush1.bf16.msra.mxu0 0
    %960 = vmatprep.subr.bf16.mxu0 0
    %961 = vmatpush1.bf16.msra.mxu0 0
    %962 = vmatprep.subr.bf16.mxu0 0
    %963 = vmatpush1.bf16.msra.mxu0 0
    %964 = vmatprep.mubr.bf16.mxu0 0
    %965 = vmatmul.mubr.bf16.gmra.mrb[0].mxu0 %v930
    %v966 = vpop.f32.mrb[0].mxu0
    %v967 = vadd.f32 0.0, %v966
    %v968 = vpop.f32.mrb[0].mxu0
    %v969 = vpop.f32.mrb[0].mxu0
    %v970 = vadd.f32 0.0, %v969
    %v971 = vpop.f32.mrb[0].mxu0
    %972 = vdwg.mxu0
    %v973 = vmul.f32 %v926, %v447
    %v974 = vmul.f32 %v927, %v447
    %v975 = vmul.f32 %v967, %v973
    %v976 = vmul.f32 %v970, %v974
    %v977 = vadd.f32 %v882, %v975
    %v978 = vadd.f32 %v883, %v976
    %979 = vset.pattern.permute.xlu0 34
    %980 = vperm.xlu0 %979, %v124
    %v981 = vpop.permute.xlu0 %980
    %983 = vset.pattern.permute.xlu0 34
    %984 = vperm.xlu0 %983, %v128
    %v985 = vpop.permute.xlu0 %984
    %v987 = vlaneseq
    %v988 = vshrl.u32 %v987, 7
    %v989 = vsub.s32 2, %v988
    %v990 = vrot.slane %v779, %v989
    %v991 = vadd.f32 %v981, %v990
    %v992 = vadd.f32 %v985, %v990
    %vm993 = vcmp.ge.f32.partialorder %v991, 0.0
    %vm994 = vcmp.ge.f32.partialorder %v992, 0.0
    %v995 = vmul.f32 %v991, 0.2
    %v996 = vmul.f32 %v992, 0.2
    %v997 = vsel %vm993, %v991, %v995
    %v998 = vsel %vm994, %v992, %v996
    %v999 = vadd.f32 %v997, %v673
    %v1000 = vadd.f32 %v998, %v674
    %v1001 = vsel %vm154, %v999, -inf
    %1002 = vmax.xlane.f32.xlu0 %v1001
    %v1003 = vpop.xlane.xlu0 %1002
    %v1004 = vsel %vm154, %v1000, -inf
    %1005 = vmax.xlane.f32.xlu0 %v1004
    %v1006 = vpop.xlane.xlu0 %1005
    %v1007 = vsub.f32 %v999, %v1003
    %v1008 = vsub.f32 %v1000, %v1006
    %v1009 = vmul.f32 %v1007, 1.442695
    %v1010 = vpow.pop %v1009
    %v1011 = vmul.f32 %v1008, 1.442695
    %v1012 = vpow.pop %v1011
    %v1013 = vsel %vm154, %v1010, 0.0
    %1014 = vadd.xlane.f32.xlu0 %v1013
    %v1015 = vpop.xlane.xlu0 %1014
    %v1016 = vsel %vm154, %v1012, 0.0
    %1017 = vadd.xlane.f32.xlu0 %v1016
    %v1018 = vpop.xlane.xlu0 %1017
    %v1019 = vrcp.pop %v1015
    %v1020 = vrcp.pop %v1018
    %v1021 = vmul.f32 %v685, %v1019
    %v1022 = vmul.f32 %v686, %v1020
    %v1023 = vpack.c.bf16 %v1012, %v1010
    %v1025 = vsel %vm154, %v1023, 0
    %1027 = vmatprep.subr.bf16.mxu0 0
    %1028 = vmatpush1.bf16.msra.mxu0 %v835
    %1029 = vmatprep.subr.bf16.mxu0 0
    %1030 = vmatpush1.bf16.msra.mxu0 0
    %1031 = vmatprep.subr.bf16.mxu0 0
    %1032 = vmatpush1.bf16.msra.mxu0 0
    %1033 = vmatprep.subr.bf16.mxu0 0
    %1034 = vmatpush1.bf16.msra.mxu0 0
    %1035 = vmatprep.subr.bf16.mxu0 0
    %1036 = vmatpush1.bf16.msra.mxu0 0
    %1037 = vmatprep.subr.bf16.mxu0 0
    %1038 = vmatpush1.bf16.msra.mxu0 0
    %1039 = vmatprep.subr.bf16.mxu0 0
    %1040 = vmatpush1.bf16.msra.mxu0 0
    %1041 = vmatprep.subr.bf16.mxu0 0
    %1042 = vmatpush1.bf16.msra.mxu0 0
    %1043 = vmatprep.subr.bf16.mxu0 0
    %1044 = vmatpush1.bf16.msra.mxu0 0
    %1045 = vmatprep.subr.bf16.mxu0 0
    %1046 = vmatpush1.bf16.msra.mxu0 0
    %1047 = vmatprep.subr.bf16.mxu0 0
    %1048 = vmatpush1.bf16.msra.mxu0 0
    %1049 = vmatprep.subr.bf16.mxu0 0
    %1050 = vmatpush1.bf16.msra.mxu0 0
    %1051 = vmatprep.subr.bf16.mxu0 0
    %1052 = vmatpush1.bf16.msra.mxu0 0
    %1053 = vmatprep.subr.bf16.mxu0 0
    %1054 = vmatpush1.bf16.msra.mxu0 0
    %1055 = vmatprep.subr.bf16.mxu0 0
    %1056 = vmatpush1.bf16.msra.mxu0 0
    %1057 = vmatprep.subr.bf16.mxu0 0
    %1058 = vmatpush1.bf16.msra.mxu0 0
    %1059 = vmatprep.mubr.bf16.mxu0 0
    %1060 = vmatmul.mubr.bf16.gmra.mrb[0].mxu0 %v1025
    %v1061 = vpop.f32.mrb[0].mxu0
    %v1062 = vadd.f32 0.0, %v1061
    %v1063 = vpop.f32.mrb[0].mxu0
    %v1064 = vpop.f32.mrb[0].mxu0
    %v1065 = vadd.f32 0.0, %v1064
    %v1066 = vpop.f32.mrb[0].mxu0
    %1067 = vdwg.mxu0
    %v1068 = vmul.f32 %v1021, %v547
    %v1069 = vmul.f32 %v1022, %v547
    %v1070 = vmul.f32 %v1062, %v1068
    %v1071 = vmul.f32 %v1065, %v1069
    %v1072 = vadd.f32 %v977, %v1070
    %v1073 = vadd.f32 %v978, %v1071
    %1074 = vset.pattern.permute.xlu0 35
    %1075 = vperm.xlu0 %1074, %v124
    %v1076 = vpop.permute.xlu0 %1075
    %1078 = vset.pattern.permute.xlu0 35
    %1079 = vperm.xlu0 %1078, %v128
    %v1080 = vpop.permute.xlu0 %1079
    %v1082 = vlaneseq
    %v1083 = vshrl.u32 %v1082, 7
    %v1084 = vsub.s32 3, %v1083
    %v1085 = vrot.slane %v779, %v1084
    %v1086 = vadd.f32 %v1076, %v1085
    %v1087 = vadd.f32 %v1080, %v1085
    %vm1088 = vcmp.ge.f32.partialorder %v1086, 0.0
    %vm1089 = vcmp.ge.f32.partialorder %v1087, 0.0
    %v1090 = vmul.f32 %v1086, 0.2
    %v1091 = vmul.f32 %v1087, 0.2
    %v1092 = vsel %vm1088, %v1086, %v1090
    %v1093 = vsel %vm1089, %v1087, %v1091
    %v1094 = vadd.f32 %v1092, %v673
    %v1095 = vadd.f32 %v1093, %v674
    %v1096 = vsel %vm154, %v1094, -inf
    %1097 = vmax.xlane.f32.xlu0 %v1096
    %v1098 = vpop.xlane.xlu0 %1097
    %v1099 = vsel %vm154, %v1095, -inf
    %1100 = vmax.xlane.f32.xlu0 %v1099
    %v1101 = vpop.xlane.xlu0 %1100
    %v1102 = vsub.f32 %v1094, %v1098
    %v1103 = vsub.f32 %v1095, %v1101
    %v1104 = vmul.f32 %v1102, 1.442695
    %v1105 = vpow.pop %v1104
    %v1106 = vmul.f32 %v1103, 1.442695
    %v1107 = vpow.pop %v1106
    %v1108 = vsel %vm154, %v1105, 0.0
    %1109 = vadd.xlane.f32.xlu0 %v1108
    %v1110 = vpop.xlane.xlu0 %1109
    %v1111 = vsel %vm154, %v1107, 0.0
    %1112 = vadd.xlane.f32.xlu0 %v1111
    %v1113 = vpop.xlane.xlu0 %1112
    %v1114 = vrcp.pop %v1110
    %v1115 = vrcp.pop %v1113
    %v1116 = vmul.f32 %v685, %v1114
    %v1117 = vmul.f32 %v686, %v1115
    %v1118 = vpack.c.bf16 %v1107, %v1105
    %v1120 = vsel %vm154, %v1118, 0
    %1122 = vmatprep.subr.bf16.mxu0 0
    %1123 = vmatpush1.bf16.msra.mxu0 %v835
    %1124 = vmatprep.subr.bf16.mxu0 0
    %1125 = vmatpush1.bf16.msra.mxu0 0
    %1126 = vmatprep.subr.bf16.mxu0 0
    %1127 = vmatpush1.bf16.msra.mxu0 0
    %1128 = vmatprep.subr.bf16.mxu0 0
    %1129 = vmatpush1.bf16.msra.mxu0 0
    %1130 = vmatprep.subr.bf16.mxu0 0
    %1131 = vmatpush1.bf16.msra.mxu0 0
    %1132 = vmatprep.subr.bf16.mxu0 0
    %1133 = vmatpush1.bf16.msra.mxu0 0
    %1134 = vmatprep.subr.bf16.mxu0 0
    %1135 = vmatpush1.bf16.msra.mxu0 0
    %1136 = vmatprep.subr.bf16.mxu0 0
    %1137 = vmatpush1.bf16.msra.mxu0 0
    %1138 = vmatprep.subr.bf16.mxu0 0
    %1139 = vmatpush1.bf16.msra.mxu0 0
    %1140 = vmatprep.subr.bf16.mxu0 0
    %1141 = vmatpush1.bf16.msra.mxu0 0
    %1142 = vmatprep.subr.bf16.mxu0 0
    %1143 = vmatpush1.bf16.msra.mxu0 0
    %1144 = vmatprep.subr.bf16.mxu0 0
    %1145 = vmatpush1.bf16.msra.mxu0 0
    %1146 = vmatprep.subr.bf16.mxu0 0
    %1147 = vmatpush1.bf16.msra.mxu0 0
    %1148 = vmatprep.subr.bf16.mxu0 0
    %1149 = vmatpush1.bf16.msra.mxu0 0
    %1150 = vmatprep.subr.bf16.mxu0 0
    %1151 = vmatpush1.bf16.msra.mxu0 0
    %1152 = vmatprep.subr.bf16.mxu0 0
    %1153 = vmatpush1.bf16.msra.mxu0 0
    %1154 = vmatprep.mubr.bf16.mxu0 0
    %1155 = vmatmul.mubr.bf16.gmra.mrb[0].mxu0 %v1120
    %v1156 = vpop.f32.mrb[0].mxu0
    %v1157 = vadd.f32 0.0, %v1156
    %v1158 = vpop.f32.mrb[0].mxu0
    %v1159 = vpop.f32.mrb[0].mxu0
    %v1160 = vadd.f32 0.0, %v1159
    %v1161 = vpop.f32.mrb[0].mxu0
    %1162 = vdwg.mxu0
    %v1163 = vmul.f32 %v1116, %v647
    %v1164 = vmul.f32 %v1117, %v647
    %v1165 = vmul.f32 %v1157, %v1163
    %v1166 = vmul.f32 %v1160, %v1164
    %v1167 = vadd.f32 %v1072, %v1165
    %v1168 = vadd.f32 %v1073, %v1166
    %v1169 = vadd.f32 %v1167, %v124
    %v1170 = vadd.f32 %v1168, %v128
    %v1171 = vld [vmem:[%s12] sm:$0x1]
    %v1173 = vlaneseq
    %v1174 = vshrl.u32 %v1173, 7
    %v1175 = vsub.s32 0, %v1174
    %v1176 = vrot.slane %v1171, %v1175
    %v1178 = vadd.f32 %v1169, %v1176
    %v1179 = vadd.f32 %v1170, %v1176
    %vm1180 = vcmp.ge.f32.partialorder %v1178, 0.0
    %vm1181 = vcmp.ge.f32.partialorder %v1179, 0.0
    %v1182 = vmul.f32 %v1178, 0.01
    %v1183 = vmul.f32 %v1179, 0.01
    %v1184 = vsel %vm1180, %v1178, %v1182
    %v1185 = vsel %vm1181, %v1179, %v1183
    %vm1186 = vcmask 261120
    %1187 = vst.msk [vmem:[#allocation2] sm:$0xff] %vm1186, %v669
    %1188 = vst.msk [vmem:[#allocation2 + $0x8] sm:$0xff] %vm1186, %v670
    %s1189 = scalar_lea.vmem [#allocation2], 16
    %1190 = vst.msk [vmem:[%s1189] sm:$0xff] %vm1186, %v1184
    %1191 = vst.msk [vmem:[%s1189 + $0x8] sm:$0xff] %vm1186, %v1185
    %v1192 = vld [vmem:[%s15] sm:$0xff]
    %v1193 = vld [vmem:[%s15 + $0x8] sm:$0xff]
    %v1194 = vld [vmem:[%s15 + $0x10] sm:$0xff]
    %v1195 = vld [vmem:[%s15 + $0x18] sm:$0xff]
    %v1196 = vld [vmem:[%s16] sm:$0x1]
    %v1198 = vlaneseq
    %v1199 = vshrl.u32 %v1198, 7
    %v1200 = vsub.s32 0, %v1199
    %v1201 = vrot.slane %v1196, %v1200
    %v1204 = vsel %vm1186, %v669, 0
    %v1207 = vsel %vm1186, %v670, 0
    %1209 = vmatprep.subr.mxu0 0.0
    %1210 = vmatpush1.msra.mxu0 %v1192
    %1211 = vmatprep.subr.mxu0 0.0
    %1212 = vmatpush1.msra.mxu0 %v1193
    %1213 = vmatprep.subr.mxu0 0.0
    %1214 = vmatpush1.msra.mxu0 %v1194
    %1215 = vmatprep.subr.mxu0 0.0
    %1216 = vmatpush1.msra.mxu0 %v1195
    %1217 = vmatprep.subr.mxu0 0.0
    %1218 = vmatpush1.msra.mxu0 0.0
    %1219 = vmatprep.subr.mxu0 0.0
    %1220 = vmatpush1.msra.mxu0 0.0
    %1221 = vmatprep.subr.mxu0 0.0
    %1222 = vmatpush1.msra.mxu0 0.0
    %1223 = vmatprep.subr.mxu0 0.0
    %1224 = vmatpush1.msra.mxu0 0.0
    %1225 = vmatprep.subr.mxu0 0.0
    %1226 = vmatpush1.msra.mxu0 0.0
    %1227 = vmatprep.subr.mxu0 0.0
    %1228 = vmatpush1.msra.mxu0 0.0
    %1229 = vmatprep.subr.mxu0 0.0
    %1230 = vmatpush1.msra.mxu0 0.0
    %1231 = vmatprep.subr.mxu0 0.0
    %1232 = vmatpush1.msra.mxu0 0.0
    %1233 = vmatprep.subr.mxu0 0.0
    %1234 = vmatpush1.msra.mxu0 0.0
    %1235 = vmatprep.subr.mxu0 0.0
    %1236 = vmatpush1.msra.mxu0 0.0
    %1237 = vmatprep.subr.mxu0 0.0
    %1238 = vmatpush1.msra.mxu0 0.0
    %1239 = vmatprep.subr.mxu0 0.0
    %1240 = vmatpush1.msra.mxu0 0.0
    %1241 = vmatprep.subr.mxu0 0.0
    %1242 = vmatpush1.msra.mxu0 0.0
    %1243 = vmatprep.subr.mxu0 0.0
    %1244 = vmatpush1.msra.mxu0 0.0
    %1245 = vmatprep.subr.mxu0 0.0
    %1246 = vmatpush1.msra.mxu0 0.0
    %1247 = vmatprep.subr.mxu0 0.0
    %1248 = vmatpush1.msra.mxu0 0.0
    %1249 = vmatprep.subr.mxu0 0.0
    %1250 = vmatpush1.msra.mxu0 0.0
    %1251 = vmatprep.subr.mxu0 0.0
    %1252 = vmatpush1.msra.mxu0 0.0
    %1253 = vmatprep.subr.mxu0 0.0
    %1254 = vmatpush1.msra.mxu0 0.0
    %1255 = vmatprep.subr.mxu0 0.0
    %1256 = vmatpush1.msra.mxu0 0.0
    %1257 = vmatprep.subr.mxu0 0.0
    %1258 = vmatpush1.msra.mxu0 0.0
    %1259 = vmatprep.subr.mxu0 0.0
    %1260 = vmatpush1.msra.mxu0 0.0
    %1261 = vmatprep.subr.mxu0 0.0
    %1262 = vmatpush1.msra.mxu0 0.0
    %1263 = vmatprep.subr.mxu0 0.0
    %1264 = vmatpush1.msra.mxu0 0.0
    %1265 = vmatprep.subr.mxu0 0.0
    %1266 = vmatpush1.msra.mxu0 0.0
    %1267 = vmatprep.subr.mxu0 0.0
    %1268 = vmatpush1.msra.mxu0 0.0
    %1269 = vmatprep.subr.mxu0 0.0
    %1270 = vmatpush1.msra.mxu0 0.0
    %1271 = vmatprep.subr.mxu0 0.0
    %1272 = vmatpush1.msra.mxu0 0.0
    %1273 = vmatprep.mubr.f32.mxu0 0.0
    %1274 = vmatmul.mubr.f32.gmra.mrb[0].mxu0 %v1204
    %v1275 = vpop.f32.mrb[0].mxu0
    %v1276 = vadd.f32 %v1201, %v1275
    %v1277 = vpop.f32.mrb[0].mxu0
    %1278 = vmatprep.mubr.f32.mxu0 0.0
    %1279 = vmatmul.mubr.f32.gmra.mrb[0].mxu0 %v1207
    %v1280 = vpop.f32.mrb[0].mxu0
    %v1281 = vadd.f32 %v1201, %v1280
    %v1282 = vpop.f32.mrb[0].mxu0
    %1283 = vdwg.mxu0
    %v1284 = vtanh.pop %v1276
    %v1285 = vtanh.pop %v1281
    %v1287 = vsel %vm1186, %v1184, 0
    %v1290 = vsel %vm1186, %v1185, 0
    %1292 = vmatprep.subr.mxu0 0.0
    %1293 = vmatpush1.msra.mxu0 %v1192
    %1294 = vmatprep.subr.mxu0 0.0
    %1295 = vmatpush1.msra.mxu0 %v1193
    %1296 = vmatprep.subr.mxu0 0.0
    %1297 = vmatpush1.msra.mxu0 %v1194
    %1298 = vmatprep.subr.mxu0 0.0
    %1299 = vmatpush1.msra.mxu0 %v1195
    %1300 = vmatprep.subr.mxu0 0.0
    %1301 = vmatpush1.msra.mxu0 0.0
    %1302 = vmatprep.subr.mxu0 0.0
    %1303 = vmatpush1.msra.mxu0 0.0
    %1304 = vmatprep.subr.mxu0 0.0
    %1305 = vmatpush1.msra.mxu0 0.0
    %1306 = vmatprep.subr.mxu0 0.0
    %1307 = vmatpush1.msra.mxu0 0.0
    %1308 = vmatprep.subr.mxu0 0.0
    %1309 = vmatpush1.msra.mxu0 0.0
    %1310 = vmatprep.subr.mxu0 0.0
    %1311 = vmatpush1.msra.mxu0 0.0
    %1312 = vmatprep.subr.mxu0 0.0
    %1313 = vmatpush1.msra.mxu0 0.0
    %1314 = vmatprep.subr.mxu0 0.0
    %1315 = vmatpush1.msra.mxu0 0.0
    %1316 = vmatprep.subr.mxu0 0.0
    %1317 = vmatpush1.msra.mxu0 0.0
    %1318 = vmatprep.subr.mxu0 0.0
    %1319 = vmatpush1.msra.mxu0 0.0
    %1320 = vmatprep.subr.mxu0 0.0
    %1321 = vmatpush1.msra.mxu0 0.0
    %1322 = vmatprep.subr.mxu0 0.0
    %1323 = vmatpush1.msra.mxu0 0.0
    %1324 = vmatprep.subr.mxu0 0.0
    %1325 = vmatpush1.msra.mxu0 0.0
    %1326 = vmatprep.subr.mxu0 0.0
    %1327 = vmatpush1.msra.mxu0 0.0
    %1328 = vmatprep.subr.mxu0 0.0
    %1329 = vmatpush1.msra.mxu0 0.0
    %1330 = vmatprep.subr.mxu0 0.0
    %1331 = vmatpush1.msra.mxu0 0.0
    %1332 = vmatprep.subr.mxu0 0.0
    %1333 = vmatpush1.msra.mxu0 0.0
    %1334 = vmatprep.subr.mxu0 0.0
    %1335 = vmatpush1.msra.mxu0 0.0
    %1336 = vmatprep.subr.mxu0 0.0
    %1337 = vmatpush1.msra.mxu0 0.0
    %1338 = vmatprep.subr.mxu0 0.0
    %1339 = vmatpush1.msra.mxu0 0.0
    %1340 = vmatprep.subr.mxu0 0.0
    %1341 = vmatpush1.msra.mxu0 0.0
    %1342 = vmatprep.subr.mxu0 0.0
    %1343 = vmatpush1.msra.mxu0 0.0
    %1344 = vmatprep.subr.mxu0 0.0
    %1345 = vmatpush1.msra.mxu0 0.0
    %1346 = vmatprep.subr.mxu0 0.0
    %1347 = vmatpush1.msra.mxu0 0.0
    %1348 = vmatprep.subr.mxu0 0.0
    %1349 = vmatpush1.msra.mxu0 0.0
    %1350 = vmatprep.subr.mxu0 0.0
    %1351 = vmatpush1.msra.mxu0 0.0
    %1352 = vmatprep.subr.mxu0 0.0
    %1353 = vmatpush1.msra.mxu0 0.0
    %1354 = vmatprep.subr.mxu0 0.0
    %1355 = vmatpush1.msra.mxu0 0.0
    %1356 = vmatprep.mubr.f32.mxu0 0.0
    %1357 = vmatmul.mubr.f32.gmra.mrb[0].mxu0 %v1287
    %v1358 = vpop.f32.mrb[0].mxu0
    %v1359 = vadd.f32 %v1201, %v1358
    %v1360 = vpop.f32.mrb[0].mxu0
    %1361 = vmatprep.mubr.f32.mxu0 0.0
    %1362 = vmatmul.mubr.f32.gmra.mrb[0].mxu0 %v1290
    %v1363 = vpop.f32.mrb[0].mxu0
    %v1364 = vadd.f32 %v1201, %v1363
    %v1365 = vpop.f32.mrb[0].mxu0
    %1366 = vdwg.mxu0
    %v1367 = vtanh.pop %v1359
    %v1368 = vtanh.pop %v1364
    %v1369 = vadd.f32 %v1284, %v1285
    %v1370 = vrot.slane %v1369, 4
    %v1371 = vadd.f32 %v1369, %v1370
    %v1372 = vrot.slane %v1371, 2
    %v1373 = vadd.f32 %v1371, %v1372
    %v1374 = vrot.slane %v1373, 1
    %v1375 = vadd.f32 %v1373, %v1374
    %v1376 = vld [vmem:[%s17] sm:$0xff]
    %v1377 = vld [vmem:[%s17 + $0x8] sm:$0xff]
    %v1378 = vld [vmem:[%s17 + $0x10] sm:$0xff]
    %v1379 = vld [vmem:[%s17 + $0x18] sm:$0xff]
    %v1380 = vld [vmem:[%s17 + $0x20] sm:$0xff]
    %v1381 = vld [vmem:[%s17 + $0x28] sm:$0xff]
    %v1382 = vld [vmem:[%s17 + $0x30] sm:$0xff]
    %v1383 = vld [vmem:[%s17 + $0x38] sm:$0xff]
    %v1384 = vld [vmem:[%s17 + $0x40] sm:$0xff]
    %v1385 = vld [vmem:[%s17 + $0x48] sm:$0xff]
    %v1386 = vld [vmem:[%s17 + $0x50] sm:$0xff]
    %v1387 = vld [vmem:[%s17 + $0x58] sm:$0xff]
    %v1388 = vld [vmem:[%s17 + $0x60] sm:$0xff]
    %v1389 = vld [vmem:[%s17 + $0x68] sm:$0xff]
    %v1390 = vld [vmem:[%s17 + $0x70] sm:$0xff]
    %v1391 = vld [vmem:[%s17 + $0x78] sm:$0xff]
    %1392 = vmatprep.subr.mxu0 0.0
    %1393 = vmatpush1.msra.mxu0 %v1376
    %1394 = vmatprep.subr.mxu0 0.0
    %1395 = vmatpush1.msra.mxu0 %v1377
    %1396 = vmatprep.subr.mxu0 0.0
    %1397 = vmatpush1.msra.mxu0 %v1378
    %1398 = vmatprep.subr.mxu0 0.0
    %1399 = vmatpush1.msra.mxu0 %v1379
    %1400 = vmatprep.subr.mxu0 0.0
    %1401 = vmatpush1.msra.mxu0 %v1380
    %1402 = vmatprep.subr.mxu0 0.0
    %1403 = vmatpush1.msra.mxu0 %v1381
    %1404 = vmatprep.subr.mxu0 0.0
    %1405 = vmatpush1.msra.mxu0 %v1382
    %1406 = vmatprep.subr.mxu0 0.0
    %1407 = vmatpush1.msra.mxu0 %v1383
    %1408 = vmatprep.subr.mxu0 0.0
    %1409 = vmatpush1.msra.mxu0 %v1384
    %1410 = vmatprep.subr.mxu0 0.0
    %1411 = vmatpush1.msra.mxu0 %v1385
    %1412 = vmatprep.subr.mxu0 0.0
    %1413 = vmatpush1.msra.mxu0 %v1386
    %1414 = vmatprep.subr.mxu0 0.0
    %1415 = vmatpush1.msra.mxu0 %v1387
    %1416 = vmatprep.subr.mxu0 0.0
    %1417 = vmatpush1.msra.mxu0 %v1388
    %1418 = vmatprep.subr.mxu0 0.0
    %1419 = vmatpush1.msra.mxu0 %v1389
    %1420 = vmatprep.subr.mxu0 0.0
    %1421 = vmatpush1.msra.mxu0 %v1390
    %1422 = vmatprep.subr.mxu0 0.0
    %1423 = vmatpush1.msra.mxu0 %v1391
    %1424 = vmatprep.subr.mxu0 0.0
    %1425 = vmatpush1.msra.mxu0 0.0
    %1426 = vmatprep.subr.mxu0 0.0
    %1427 = vmatpush1.msra.mxu0 0.0
    %1428 = vmatprep.subr.mxu0 0.0
    %1429 = vmatpush1.msra.mxu0 0.0
    %1430 = vmatprep.subr.mxu0 0.0
    %1431 = vmatpush1.msra.mxu0 0.0
    %1432 = vmatprep.subr.mxu0 0.0
    %1433 = vmatpush1.msra.mxu0 0.0
    %1434 = vmatprep.subr.mxu0 0.0
    %1435 = vmatpush1.msra.mxu0 0.0
    %1436 = vmatprep.subr.mxu0 0.0
    %1437 = vmatpush1.msra.mxu0 0.0
    %1438 = vmatprep.subr.mxu0 0.0
    %1439 = vmatpush1.msra.mxu0 0.0
    %1440 = vmatprep.subr.mxu0 0.0
    %1441 = vmatpush1.msra.mxu0 0.0
    %1442 = vmatprep.subr.mxu0 0.0
    %1443 = vmatpush1.msra.mxu0 0.0
    %1444 = vmatprep.subr.mxu0 0.0
    %1445 = vmatpush1.msra.mxu0 0.0
    %1446 = vmatprep.subr.mxu0 0.0
    %1447 = vmatpush1.msra.mxu0 0.0
    %1448 = vmatprep.subr.mxu0 0.0
    %1449 = vmatpush1.msra.mxu0 0.0
    %1450 = vmatprep.subr.mxu0 0.0
    %1451 = vmatpush1.msra.mxu0 0.0
    %1452 = vmatprep.subr.mxu0 0.0
    %1453 = vmatpush1.msra.mxu0 0.0
    %1454 = vmatprep.subr.mxu0 0.0
    %1455 = vmatpush1.msra.mxu0 0.0
    %1456 = vmatprep.mubr.f32.mxu0 0.0
    %1457 = vmatmul.mubr.f32.gmra.mrb[0].mxu0 %v1375
    %v1458 = vpop.f32.mrb[0].mxu0
    %v1459 = vadd.f32 0.0, %v1458
    %v1460 = vpop.f32.mrb[0].mxu0
    %1461 = vdwg.mxu0
    %v1462 = vadd.f32 %v1367, %v1368
    %v1463 = vrot.slane %v1462, 4
    %v1464 = vadd.f32 %v1462, %v1463
    %v1465 = vrot.slane %v1464, 2
    %v1466 = vadd.f32 %v1464, %v1465
    %v1467 = vrot.slane %v1466, 1
    %v1468 = vadd.f32 %v1466, %v1467
    %1469 = vmatprep.subr.mxu0 0.0
    %1470 = vmatpush1.msra.mxu0 %v1376
    %1471 = vmatprep.subr.mxu0 0.0
    %1472 = vmatpush1.msra.mxu0 %v1377
    %1473 = vmatprep.subr.mxu0 0.0
    %1474 = vmatpush1.msra.mxu0 %v1378
    %1475 = vmatprep.subr.mxu0 0.0
    %1476 = vmatpush1.msra.mxu0 %v1379
    %1477 = vmatprep.subr.mxu0 0.0
    %1478 = vmatpush1.msra.mxu0 %v1380
    %1479 = vmatprep.subr.mxu0 0.0
    %1480 = vmatpush1.msra.mxu0 %v1381
    %1481 = vmatprep.subr.mxu0 0.0
    %1482 = vmatpush1.msra.mxu0 %v1382
    %1483 = vmatprep.subr.mxu0 0.0
    %1484 = vmatpush1.msra.mxu0 %v1383
    %1485 = vmatprep.subr.mxu0 0.0
    %1486 = vmatpush1.msra.mxu0 %v1384
    %1487 = vmatprep.subr.mxu0 0.0
    %1488 = vmatpush1.msra.mxu0 %v1385
    %1489 = vmatprep.subr.mxu0 0.0
    %1490 = vmatpush1.msra.mxu0 %v1386
    %1491 = vmatprep.subr.mxu0 0.0
    %1492 = vmatpush1.msra.mxu0 %v1387
    %1493 = vmatprep.subr.mxu0 0.0
    %1494 = vmatpush1.msra.mxu0 %v1388
    %1495 = vmatprep.subr.mxu0 0.0
    %1496 = vmatpush1.msra.mxu0 %v1389
    %1497 = vmatprep.subr.mxu0 0.0
    %1498 = vmatpush1.msra.mxu0 %v1390
    %1499 = vmatprep.subr.mxu0 0.0
    %1500 = vmatpush1.msra.mxu0 %v1391
    %1501 = vmatprep.subr.mxu0 0.0
    %1502 = vmatpush1.msra.mxu0 0.0
    %1503 = vmatprep.subr.mxu0 0.0
    %1504 = vmatpush1.msra.mxu0 0.0
    %1505 = vmatprep.subr.mxu0 0.0
    %1506 = vmatpush1.msra.mxu0 0.0
    %1507 = vmatprep.subr.mxu0 0.0
    %1508 = vmatpush1.msra.mxu0 0.0
    %1509 = vmatprep.subr.mxu0 0.0
    %1510 = vmatpush1.msra.mxu0 0.0
    %1511 = vmatprep.subr.mxu0 0.0
    %1512 = vmatpush1.msra.mxu0 0.0
    %1513 = vmatprep.subr.mxu0 0.0
    %1514 = vmatpush1.msra.mxu0 0.0
    %1515 = vmatprep.subr.mxu0 0.0
    %1516 = vmatpush1.msra.mxu0 0.0
    %1517 = vmatprep.subr.mxu0 0.0
    %1518 = vmatpush1.msra.mxu0 0.0
    %1519 = vmatprep.subr.mxu0 0.0
    %1520 = vmatpush1.msra.mxu0 0.0
    %1521 = vmatprep.subr.mxu0 0.0
    %1522 = vmatpush1.msra.mxu0 0.0
    %1523 = vmatprep.subr.mxu0 0.0
    %1524 = vmatpush1.msra.mxu0 0.0
    %1525 = vmatprep.subr.mxu0 0.0
    %1526 = vmatpush1.msra.mxu0 0.0
    %1527 = vmatprep.subr.mxu0 0.0
    %1528 = vmatpush1.msra.mxu0 0.0
    %1529 = vmatprep.subr.mxu0 0.0
    %1530 = vmatpush1.msra.mxu0 0.0
    %1531 = vmatprep.subr.mxu0 0.0
    %1532 = vmatpush1.msra.mxu0 0.0
    %1533 = vmatprep.mubr.f32.mxu0 0.0
    %1534 = vmatmul.mubr.f32.gmra.mrb[0].mxu0 %v1468
    %v1535 = vpop.f32.mrb[0].mxu0
    %v1536 = vadd.f32 0.0, %v1535
    %v1537 = vpop.f32.mrb[0].mxu0
    %1538 = vdwg.mxu0
    %v1539 = vlaneseq
    %v1540 = vshrl.u32 %v1539, 7
    %v1541 = vlaneseq
    %v1542 = vand.u32 %v1541, 127
    %vm1543 = vcmp.eq.s32.totalorder %v1540, 0
    %vm1544 = vcmp.eq.s32.totalorder %v1542, 0
    %vm1545 = vmand %vm1543, %vm1544
    %s1547 = vtos %v1459
    %v1548 = vstv %s1547
    %v1550 = vsel %vm1545, %v1548, 0.0
    %vm1551 = vcmp.eq.s32.totalorder %v1542, 1
    %vm1552 = vmand %vm1543, %vm1551
    %s1554 = vtos %v1536
    %v1555 = vstv %s1554
    %v1557 = vsel %vm1552, %v1555, 0.0
    %v1558 = vadd.f32 %v1550, %v1557
    %1559 = vst [vmem:[#allocation4] sm:$0xff] %v1558
    // Predicated region
    $region74: #{tpu_custom_call.1} parent=1 // pred_check
      _
    $region75: #{tpu_custom_call.1} parent=1 // pred_check_branch
      %1561 = sbr.rel (0) target = $region77
    $region76: #{tpu_custom_call.1} parent=1 // pred_region
      %s1563 = ssub.s32 512, 512
      %1564 = vsyncadd [#allocation3], %s1563
      %s1565 = sshll.u32 [#allocation2], 4
      %s1566 = int_to_ptr.vmem [resolvable:$true] %s1565
      %1571 = dma.vmem_to_hbm [thread:$0]  %s1566, 512, %s18, [#allocation3], 128, 128, 8
    $region77: #{tpu_custom_call.1} parent=1 // pred_fallthru
      _
    // Predicated region
    $region78: #{tpu_custom_call.1} parent=1 // pred_check
      _
    $region79: #{tpu_custom_call.1} parent=1 // pred_check_branch
      %1573 = sbr.rel (0) target = $region81
    $region80: #{tpu_custom_call.1} parent=1 // pred_region
      %s1575 = ssub.s32 128, 128
      %1576 = vsyncadd [#allocation5], %s1575
      %s1578 = sshll.u32 [#allocation4], 4
      %s1579 = int_to_ptr.vmem [resolvable:$true] %s1578
      %1581 = dma.vmem_to_hbm [thread:$0]  %s1579, 128, %s19, [#allocation5]
    $region81: #{tpu_custom_call.1} parent=1 // pred_fallthru
      _
    // Predicated region
    $region82: #{tpu_custom_call.1} parent=1 // pred_check
      _
    $region83: #{tpu_custom_call.1} parent=1 // pred_check_branch
      %1583 = sbr.rel (0) target = $region85
    $region84: #{tpu_custom_call.1} parent=1 // pred_region
      %1584 = dma.done [#allocation3], 512
    $region85: #{tpu_custom_call.1} parent=1 // pred_fallthru
      _
    // Predicated region
    $region86: #{tpu_custom_call.1} parent=1 // pred_check
      _
    $region87: #{tpu_custom_call.1} parent=1 // pred_check_branch
      %1586 = sbr.rel (0) target = $region89
    $region88: #{tpu_custom_call.1} parent=1 // pred_region
      %1587 = dma.done [#allocation5], 128
    $region89: #{tpu_custom_call.1} parent=1 // pred_fallthru
      _
    %1588 = vsyncpa [#allocation3], 1
    %1589 = vsyncpa [#allocation5], 1

</llo_original>
